<compile_context>
chip_gen: v5e
topology: v5e:2x2
jax: 0.10.0
libtpu: 0.0.40
codegen_flags: <defaults>
</compile_context>

<pallas_src>
import functools

import jax
import jax.numpy as jnp
from jax import lax
from jax.experimental import pallas as pl
from jax.experimental.pallas import tpu as pltpu

NEG_SLOPE = 0.01   # nn.LeakyReLU default negative_slope
BN_EPS = 1e-5      # nn.BatchNorm2d default eps
LANE = 128


def _round_up(v, m):
    return ((v + m - 1) // m) * m


def _leaky(v):
    return jnp.where(v >= 0, v, NEG_SLOPE * v)


# ------------------------------ Pallas kernels ------------------------------


def conv1_fused_kernel(ph_ref, mask_ref, s1_ref, b1_ref, w1_ref, s2_ref, b2_ref,
                       o_ref, *, stride, Ho, Wo):
    """bn1 + LeakyReLU + 3x3/stride conv1 + bn2 + LeakyReLU for one image.

    ph_ref : (stride*stride, Hph, Wph, Cin_p) f32  phase-decomposed zero-padded x
    mask   : (stride*stride, Hph, Wph, 1)    f32  1 inside the image, 0 on pad ring
    w1_ref : (9, Cin_p, Cout_p)              bf16 tap weights
    o_ref  : (1, Ho, Wo, Cout_p)             f32
    """
    cout = o_ref.shape[-1]
    x = ph_ref[...]                                    # f32
    a = x * s1_ref[0] + b1_ref[0]                      # bn1 (inference affine)
    a = _leaky(a)
    a = a * mask_ref[...]                              # conv zero-padding ring

    acc = jnp.zeros((Ho * Wo, cout), jnp.float32)
    for kh in range(3):
        for kw in range(3):
            p = (kh % stride) * stride + (kw % stride)
            oh, ow = kh // stride, kw // stride
            win = a[p, oh:oh + Ho, ow:ow + Wo, :].reshape(Ho * Wo, -1)
            acc = acc + jnp.dot(win.astype(jnp.bfloat16), w1_ref[kh * 3 + kw],
                                preferred_element_type=jnp.float32)

    y = _leaky(acc * s2_ref[0] + b2_ref[0])            # bn2 + LeakyReLU (f32)
    o_ref[...] = y.reshape(1, Ho, Wo, cout)


def conv2_residual_kernel(hp_ref, xs_ref, s1_ref, b1_ref, ws_ref, w2_ref, o_ref,
                          *, Ho, Wo, shortcut_conv):
    """3x3 stride-1 conv2 + (1x1 shortcut conv | identity) + residual add.

    hp_ref : (1, Ho+2, Wo+2, Cout_p) f32  zero-padded conv2 input
    xs_ref : (1, Ho, Wo, Cin_p)      f32  (strided) x for the shortcut path
    ws_ref : (Cin_p, Cout_p)         bf16 1x1 shortcut weight (unused if identity)
    o_ref  : (1, Ho, Wo, Cout_p)     f32
    """
    cout = o_ref.shape[-1]
    hp = hp_ref[0]                                     # (Ho+2, Wo+2, Cout_p)

    acc = jnp.zeros((Ho * Wo, cout), jnp.float32)
    for kh in range(3):
        for kw in range(3):
            win = hp[kh:kh + Ho, kw:kw + Wo, :].reshape(Ho * Wo, -1)
            acc = acc + jnp.dot(win.astype(jnp.bfloat16), w2_ref[kh * 3 + kw],
                                preferred_element_type=jnp.float32)

    if shortcut_conv:
        xs = xs_ref[0]                                 # (Ho, Wo, Cin_p)
        a = _leaky(xs * s1_ref[0] + b1_ref[0]).reshape(Ho * Wo, -1)
        res = jnp.dot(a.astype(jnp.bfloat16), ws_ref[...],
                      preferred_element_type=jnp.float32)
    else:
        res = xs_ref[0].reshape(Ho * Wo, cout)         # identity shortcut

    o_ref[...] = (acc + res).reshape(1, Ho, Wo, cout)


# ------------------------------ glue (plain JAX) ----------------------------


def _bn_affine(gamma, beta, mean, var, cpad):
    scale = gamma / jnp.sqrt(var + BN_EPS)
    bias = beta - mean * scale
    scale = jnp.pad(scale, (0, cpad - scale.shape[0])).reshape(1, cpad)
    bias = jnp.pad(bias, (0, cpad - bias.shape[0])).reshape(1, cpad)
    return scale.astype(jnp.float32), bias.astype(jnp.float32)


def _pad_weight_3x3(w, cin_p, cout_p):
    # torch (Cout, Cin, 3, 3) -> (9, Cin_p, Cout_p), zero padded, bf16
    cout, cin = w.shape[0], w.shape[1]
    wm = jnp.transpose(w, (2, 3, 1, 0)).reshape(9, cin, cout)
    wm = jnp.pad(wm, ((0, 0), (0, cin_p - cin), (0, cout_p - cout)))
    return wm.astype(jnp.bfloat16)


def _build_phases_and_mask(xch, stride):
    """Phase-decompose the zero-padded input so every conv tap is a plain slice."""
    N, H, W, Cp = xch.shape
    s = stride
    Ho = (H + 2 - 3) // s + 1
    Wo = (W + 2 - 3) // s + 1
    Hph = Ho + 2 // s
    Wph = Wo + 2 // s
    xpad = jnp.pad(xch, ((0, 0), (1, 1), (1, 1), (0, 0)))
    xpad = jnp.pad(xpad, ((0, 0),
                          (0, max(0, s * Hph - (H + 2))),
                          (0, max(0, s * Wph - (W + 2))),
                          (0, 0)))
    ivec = jnp.arange(Hph)
    jvec = jnp.arange(Wph)
    phases, masks = [], []
    for ph in range(s):
        for pw in range(s):
            phases.append(xpad[:, ph::s, pw::s, :][:, :Hph, :Wph, :])
            r = s * ivec + ph
            c = s * jvec + pw
            m = ((r >= 1) & (r <= H))[:, None] & ((c >= 1) & (c <= W))[None, :]
            masks.append(m)
    phases = jnp.stack(phases, axis=1).reshape(N * s * s, Hph, Wph, Cp)
    mask = jnp.stack(masks, axis=0).astype(jnp.float32)[..., None]  # (s*s,Hph,Wph,1)
    return phases, mask, Ho, Wo, Hph, Wph


def _const_spec(shape):
    nd = len(shape)
    return pl.BlockSpec(shape, lambda n: (0,) * nd)


def basic_block_forward(x_nchw, p, stride):
    # TODO(synk): BatchNorm uses inference-mode running statistics; training-mode
    # batch statistics are not implemented.
    # TODO(synk): dropout path (droprate > 0) not implemented; module default is 0.0.
    Cout = p["w1"].shape[0]
    Cin = x_nchw.shape[1]
    equal_in_out = (Cin == Cout)
    if equal_in_out and stride != 1:
        raise NotImplementedError(
            "identity shortcut with stride != 1 is ill-defined (same as the PyTorch module)")

    N, _, H, W = x_nchw.shape
    cin_p = max(LANE, _round_up(Cin, LANE))
    cout_p = max(LANE, _round_up(Cout, LANE))

    x = jnp.transpose(x_nchw, (0, 2, 3, 1)).astype(jnp.float32)        # NHWC
    x = jnp.pad(x, ((0, 0), (0, 0), (0, 0), (0, cin_p - Cin)))         # lane-dense C

    scale1, bias1 = _bn_affine(p["gamma1"], p["beta1"], p["mean1"], p["var1"], cin_p)
    scale2, bias2 = _bn_affine(p["gamma2"], p["beta2"], p["mean2"], p["var2"], cout_p)
    w1m = _pad_weight_3x3(p["w1"], cin_p, cout_p)
    w2m = _pad_weight_3x3(p["w2"], cout_p, cout_p)
    if equal_in_out:
        wsm = jnp.zeros((cin_p, cout_p), jnp.bfloat16)                 # unused
    else:
        ws = jnp.transpose(p["ws"][:, :, 0, 0], (1, 0))                # (Cin, Cout)
        wsm = jnp.pad(ws, ((0, cin_p - Cin), (0, cout_p - Cout))).astype(jnp.bfloat16)

    phases, mask, Ho, Wo, Hph, Wph = _build_phases_and_mask(x, stride)
    s2cnt = stride * stride

    cparams = pltpu.CompilerParams(dimension_semantics=("parallel",),
                                   vmem_limit_bytes=48 * 1024 * 1024)

    # kernel A: bn1 + LeakyReLU + conv1(3x3, stride) + bn2 + LeakyReLU, per image
    h = pl.pallas_call(
        functools.partial(conv1_fused_kernel, stride=stride, Ho=Ho, Wo=Wo),
        out_shape=jax.ShapeDtypeStruct((N, Ho, Wo, cout_p), jnp.float32),
        grid=(N,),
        in_specs=[
            pl.BlockSpec((s2cnt, Hph, Wph, cin_p), lambda n: (n, 0, 0, 0)),
            _const_spec((s2cnt, Hph, Wph, 1)),
            _const_spec((1, cin_p)),
            _const_spec((1, cin_p)),
            _const_spec((9, cin_p, cout_p)),
            _const_spec((1, cout_p)),
            _const_spec((1, cout_p)),
        ],
        out_specs=pl.BlockSpec((1, Ho, Wo, cout_p), lambda n: (n, 0, 0, 0)),
        compiler_params=cparams,
    )(phases, mask, scale1, bias1, w1m, scale2, bias2)

    # kernel B: conv2(3x3, stride 1) + fused shortcut + residual add, per image
    hpad = jnp.pad(h, ((0, 0), (1, 1), (1, 1), (0, 0)))
    if equal_in_out:
        xs = x                                   # identity residual (stride == 1)
    else:
        xs = x[:, ::stride, ::stride, :]         # input to the 1x1 stride-s shortcut
    out = pl.pallas_call(
        functools.partial(conv2_residual_kernel, Ho=Ho, Wo=Wo,
                          shortcut_conv=not equal_in_out),
        out_shape=jax.ShapeDtypeStruct((N, Ho, Wo, cout_p), jnp.float32),
        grid=(N,),
        in_specs=[
            pl.BlockSpec((1, Ho + 2, Wo + 2, cout_p), lambda n: (n, 0, 0, 0)),
            pl.BlockSpec((1, Ho, Wo, cin_p), lambda n: (n, 0, 0, 0)),
            _const_spec((1, cin_p)),
            _const_spec((1, cin_p)),
            _const_spec((cin_p, cout_p)),
            _const_spec((9, cout_p, cout_p)),
        ],
        out_specs=pl.BlockSpec((1, Ho, Wo, cout_p), lambda n: (n, 0, 0, 0)),
        compiler_params=cparams,
    )(hpad, xs, scale1, bias1, wsm, w2m)

    out = out[:, :, :, :Cout]                          # drop lane padding
    return jnp.transpose(out, (0, 3, 1, 2))            # back to NCHW


# ------------------------------ pure-JAX reference --------------------------


def reference_forward(x_nchw, p, stride, *, mxu_bf16=False):
    Cout = p["w1"].shape[0]
    Cin = x_nchw.shape[1]
    equal_in_out = (Cin == Cout)
    cast = (lambda a: a.astype(jnp.bfloat16)) if mxu_bf16 else (lambda a: a)

    x = jnp.transpose(x_nchw, (0, 2, 3, 1)).astype(jnp.float32)
    scale1 = p["gamma1"] / jnp.sqrt(p["var1"] + BN_EPS)
    bias1 = p["beta1"] - p["mean1"] * scale1
    scale2 = p["gamma2"] / jnp.sqrt(p["var2"] + BN_EPS)
    bias2 = p["beta2"] - p["mean2"] * scale2
    dn = ("NHWC", "HWIO", "NHWC")

    act = _leaky(x * scale1 + bias1)
    c1 = lax.conv_general_dilated(cast(act), cast(jnp.transpose(p["w1"], (2, 3, 1, 0))),
                                  (stride, stride), ((1, 1), (1, 1)),
                                  dimension_numbers=dn,
                                  preferred_element_type=jnp.float32)
    h = _leaky(c1 * scale2 + bias2)
    c2 = lax.conv_general_dilated(cast(h), cast(jnp.transpose(p["w2"], (2, 3, 1, 0))),
                                  (1, 1), ((1, 1), (1, 1)), dimension_numbers=dn,
                                  preferred_element_type=jnp.float32)
    if equal_in_out:
        sc = x
    else:
        sc = lax.conv_general_dilated(cast(act), cast(jnp.transpose(p["ws"], (2, 3, 1, 0))),
                                      (stride, stride), ((0, 0), (0, 0)),
                                      dimension_numbers=dn,
                                      preferred_element_type=jnp.float32)
    return jnp.transpose(sc + c2, (0, 3, 1, 2))


# ----------------------------------- main ------------------------------------


if __name__ == "__main__":
    key = jax.random.PRNGKey(0)

    def make_params(k, cin, cout, with_shortcut):
        ks = jax.random.split(k, 11)
        prm = dict(
            gamma1=jax.random.uniform(ks[0], (cin,), minval=0.5, maxval=1.5),
            beta1=0.1 * jax.random.normal(ks[1], (cin,)),
            mean1=0.1 * jax.random.normal(ks[2], (cin,)),
            var1=jax.random.uniform(ks[3], (cin,), minval=0.5, maxval=1.5),
            gamma2=jax.random.uniform(ks[4], (cout,), minval=0.5, maxval=1.5),
            beta2=0.1 * jax.random.normal(ks[5], (cout,)),
            mean2=0.1 * jax.random.normal(ks[6], (cout,)),
            var2=jax.random.uniform(ks[7], (cout,), minval=0.5, maxval=1.5),
            w1=0.1 * jax.random.normal(ks[8], (cout, cin, 3, 3)),
            w2=0.1 * jax.random.normal(ks[9], (cout, cout, 3, 3)),
        )
        if with_shortcut:
            prm["ws"] = 0.1 * jax.random.normal(ks[10], (cout, cin, 1, 1))
        return prm

    configs = [
        # (in_planes, out_planes, stride, N, H, W)
        (4, 8, 2, 2, 16, 16),   # shortcut-conv path (not equalInOut)
        (8, 8, 1, 2, 16, 16),   # identity-shortcut path (equalInOut)
    ]
    for idx, (cin, cout, stride, N, H, W) in enumerate(configs):
        k1, k2, key = jax.random.split(key, 3)
        x = jax.random.normal(k1, (N, cin, H, W), jnp.float32)
        params = make_params(k2, cin, cout, with_shortcut=(cin != cout))

        out = jax.block_until_ready(basic_block_forward(x, params, stride))
        Ho = (H + 2 - 3) // stride + 1
        assert out.shape == (N, cout, Ho, Ho), out.shape

        # exact-structure check (reference with the same bf16 MXU operands)
        ref_q = reference_forward(x, params, stride, mxu_bf16=True)
        err_q = float(jnp.max(jnp.abs(out - ref_q)))
        assert jnp.allclose(out, ref_q, rtol=2e-3, atol=2e-3), (idx, err_q)

        # full-f32 module semantics check (loose tolerance for bf16 MXU inputs)
        ref_f = reference_forward(x, params, stride, mxu_bf16=False)
        err_f = float(jnp.max(jnp.abs(out - ref_f)))
        assert jnp.allclose(out, ref_f, rtol=5e-2, atol=5e-2), (idx, err_f)

    print("KERNEL_OK")
</pallas_src>

<mosaic_0001>
module attributes {stable_mosaic.version = 11 : i64} {
  func.func @conv1_fused_kernel(%arg0: i32, %arg1: memref<4x9x9x128xf32, #tpu.memory_space<vmem>>, %arg2: memref<4x9x9x1xf32, #tpu.memory_space<vmem>>, %arg3: memref<1x128xf32, #tpu.memory_space<vmem>>, %arg4: memref<1x128xf32, #tpu.memory_space<vmem>>, %arg5: memref<9x128x128xbf16, #tpu.memory_space<vmem>>, %arg6: memref<1x128xf32, #tpu.memory_space<vmem>>, %arg7: memref<1x128xf32, #tpu.memory_space<vmem>>, %arg8: memref<1x8x8x128xf32, #tpu.memory_space<vmem>>) attributes {dimension_semantics = [#tpu.dimension_semantics<parallel>], iteration_bounds = array<i64: 2>, scalar_prefetch = 0 : i64, scratch_operands = 0 : i64, tpu.core_type = #tpu.core_type<tc>, window_params = [{transform_indices = @transform_0, window_bounds = array<i64: 4, 9, 9, 128>}, {pipeline_mode = #tpu.pipeline_mode<synchronous>, transform_indices = @transform_1, window_bounds = array<i64: 4, 9, 9, 1>}, {pipeline_mode = #tpu.pipeline_mode<synchronous>, transform_indices = @transform_2, window_bounds = array<i64: 1, 128>}, {pipeline_mode = #tpu.pipeline_mode<synchronous>, transform_indices = @transform_3, window_bounds = array<i64: 1, 128>}, {pipeline_mode = #tpu.pipeline_mode<synchronous>, transform_indices = @transform_4, window_bounds = array<i64: 9, 128, 128>}, {pipeline_mode = #tpu.pipeline_mode<synchronous>, transform_indices = @transform_5, window_bounds = array<i64: 1, 128>}, {pipeline_mode = #tpu.pipeline_mode<synchronous>, transform_indices = @transform_6, window_bounds = array<i64: 1, 128>}, {transform_indices = @transform_7, window_bounds = array<i64: 1, 8, 8, 128>}]} {
    %c0 = arith.constant 0 : index
    %c0_0 = arith.constant 0 : index
    %c0_1 = arith.constant 0 : index
    %c0_2 = arith.constant 0 : index
    %0 = vector.load %arg1[%c0, %c0_0, %c0_1, %c0_2] : memref<4x9x9x128xf32, #tpu.memory_space<vmem>>, vector<4x9x9x128xf32>
    %c0_3 = arith.constant 0 : index
    %c0_4 = arith.constant 0 : index
    %1 = vector.load %arg3[%c0_3, %c0_4] : memref<1x128xf32, #tpu.memory_space<vmem>>, vector<1x128xf32>
    %2 = vector.shape_cast %1 : vector<1x128xf32> to vector<128xf32>
    %3 = vector.shape_cast %2 : vector<128xf32> to vector<1x1x1x128xf32>
    %4 = vector.broadcast %3 : vector<1x1x1x128xf32> to vector<4x9x9x128xf32>
    %5 = arith.mulf %0, %4 : vector<4x9x9x128xf32>
    %c0_5 = arith.constant 0 : index
    %c0_6 = arith.constant 0 : index
    %6 = vector.load %arg4[%c0_5, %c0_6] : memref<1x128xf32, #tpu.memory_space<vmem>>, vector<1x128xf32>
    %7 = vector.shape_cast %6 : vector<1x128xf32> to vector<128xf32>
    %8 = vector.shape_cast %7 : vector<128xf32> to vector<1x1x1x128xf32>
    %9 = vector.broadcast %8 : vector<1x1x1x128xf32> to vector<4x9x9x128xf32>
    %10 = arith.addf %5, %9 : vector<4x9x9x128xf32>
    %cst = arith.constant 0.000000e+00 : f32
    %11 = vector.broadcast %cst : f32 to vector<4x9x9x128xf32>
    %12 = arith.cmpf oge, %10, %11 : vector<4x9x9x128xf32>
    %cst_7 = arith.constant 0.00999999977 : f32
    %13 = vector.broadcast %cst_7 : f32 to vector<4x9x9x128xf32>
    %14 = arith.mulf %13, %10 : vector<4x9x9x128xf32>
    %15 = arith.select %12, %10, %14 : vector<4x9x9x128xi1>, vector<4x9x9x128xf32>
    %c0_8 = arith.constant 0 : index
    %c0_9 = arith.constant 0 : index
    %c0_10 = arith.constant 0 : index
    %c0_11 = arith.constant 0 : index
    %16 = vector.load %arg2[%c0_8, %c0_9, %c0_10, %c0_11] : memref<4x9x9x1xf32, #tpu.memory_space<vmem>>, vector<4x9x9x1xf32>
    %17 = vector.broadcast %16 : vector<4x9x9x1xf32> to vector<4x9x9x128xf32>
    %18 = arith.mulf %15, %17 : vector<4x9x9x128xf32>
    %cst_12 = arith.constant 0.000000e+00 : f32
    %19 = vector.broadcast %cst_12 : f32 to vector<64x128xf32>
    %20 = vector.extract_strided_slice %18 {offsets = [0, 0, 0, 0], sizes = [1, 8, 8, 128], strides = [1, 1, 1, 1]} : vector<4x9x9x128xf32> to vector<1x8x8x128xf32>
    %21 = vector.shape_cast %20 : vector<1x8x8x128xf32> to vector<8x8x128xf32>
    %22 = vector.shape_cast %21 : vector<8x8x128xf32> to vector<64x128xf32>
    %23 = arith.truncf %22 : vector<64x128xf32> to vector<64x128xbf16>
    %c0_13 = arith.constant 0 : index
    %c0_14 = arith.constant 0 : index
    %c0_15 = arith.constant 0 : index
    %24 = vector.load %arg5[%c0_13, %c0_14, %c0_15] : memref<9x128x128xbf16, #tpu.memory_space<vmem>>, vector<1x128x128xbf16>
    %25 = vector.shape_cast %24 : vector<1x128x128xbf16> to vector<128x128xbf16>
    %cst_16 = arith.constant dense<0.000000e+00> : vector<64x128xf32>
    %26 = tpu.matmul %23, %25, %cst_16 {dimension_numbers = #tpu.dot_dimension_numbers<[1], [0], [0], [1], [0, 0, 1, 1], [], []>} : vector<64x128xbf16>, vector<128x128xbf16>, vector<64x128xf32> -> vector<64x128xf32>
    %27 = arith.addf %19, %26 : vector<64x128xf32>
    %28 = vector.extract_strided_slice %18 {offsets = [1, 0, 0, 0], sizes = [1, 8, 8, 128], strides = [1, 1, 1, 1]} : vector<4x9x9x128xf32> to vector<1x8x8x128xf32>
    %29 = vector.shape_cast %28 : vector<1x8x8x128xf32> to vector<8x8x128xf32>
    %30 = vector.shape_cast %29 : vector<8x8x128xf32> to vector<64x128xf32>
    %31 = arith.truncf %30 : vector<64x128xf32> to vector<64x128xbf16>
    %c1 = arith.constant 1 : index
    %c0_17 = arith.constant 0 : index
    %c0_18 = arith.constant 0 : index
    %32 = vector.load %arg5[%c1, %c0_17, %c0_18] : memref<9x128x128xbf16, #tpu.memory_space<vmem>>, vector<1x128x128xbf16>
    %33 = vector.shape_cast %32 : vector<1x128x128xbf16> to vector<128x128xbf16>
    %cst_19 = arith.constant dense<0.000000e+00> : vector<64x128xf32>
    %34 = tpu.matmul %31, %33, %cst_19 {dimension_numbers = #tpu.dot_dimension_numbers<[1], [0], [0], [1], [0, 0, 1, 1], [], []>} : vector<64x128xbf16>, vector<128x128xbf16>, vector<64x128xf32> -> vector<64x128xf32>
    %35 = arith.addf %27, %34 : vector<64x128xf32>
    %36 = vector.extract_strided_slice %18 {offsets = [0, 0, 1, 0], sizes = [1, 8, 8, 128], strides = [1, 1, 1, 1]} : vector<4x9x9x128xf32> to vector<1x8x8x128xf32>
    %37 = vector.shape_cast %36 : vector<1x8x8x128xf32> to vector<8x8x128xf32>
    %38 = vector.shape_cast %37 : vector<8x8x128xf32> to vector<64x128xf32>
    %39 = arith.truncf %38 : vector<64x128xf32> to vector<64x128xbf16>
    %c2 = arith.constant 2 : index
    %c0_20 = arith.constant 0 : index
    %c0_21 = arith.constant 0 : index
    %40 = vector.load %arg5[%c2, %c0_20, %c0_21] : memref<9x128x128xbf16, #tpu.memory_space<vmem>>, vector<1x128x128xbf16>
    %41 = vector.shape_cast %40 : vector<1x128x128xbf16> to vector<128x128xbf16>
    %cst_22 = arith.constant dense<0.000000e+00> : vector<64x128xf32>
    %42 = tpu.matmul %39, %41, %cst_22 {dimension_numbers = #tpu.dot_dimension_numbers<[1], [0], [0], [1], [0, 0, 1, 1], [], []>} : vector<64x128xbf16>, vector<128x128xbf16>, vector<64x128xf32> -> vector<64x128xf32>
    %43 = arith.addf %35, %42 : vector<64x128xf32>
    %44 = vector.extract_strided_slice %18 {offsets = [2, 0, 0, 0], sizes = [1, 8, 8, 128], strides = [1, 1, 1, 1]} : vector<4x9x9x128xf32> to vector<1x8x8x128xf32>
    %45 = vector.shape_cast %44 : vector<1x8x8x128xf32> to vector<8x8x128xf32>
    %46 = vector.shape_cast %45 : vector<8x8x128xf32> to vector<64x128xf32>
    %47 = arith.truncf %46 : vector<64x128xf32> to vector<64x128xbf16>
    %c3 = arith.constant 3 : index
    %c0_23 = arith.constant 0 : index
    %c0_24 = arith.constant 0 : index
    %48 = vector.load %arg5[%c3, %c0_23, %c0_24] : memref<9x128x128xbf16, #tpu.memory_space<vmem>>, vector<1x128x128xbf16>
    %49 = vector.shape_cast %48 : vector<1x128x128xbf16> to vector<128x128xbf16>
    %cst_25 = arith.constant dense<0.000000e+00> : vector<64x128xf32>
    %50 = tpu.matmul %47, %49, %cst_25 {dimension_numbers = #tpu.dot_dimension_numbers<[1], [0], [0], [1], [0, 0, 1, 1], [], []>} : vector<64x128xbf16>, vector<128x128xbf16>, vector<64x128xf32> -> vector<64x128xf32>
    %51 = arith.addf %43, %50 : vector<64x128xf32>
    %52 = vector.extract_strided_slice %18 {offsets = [3, 0, 0, 0], sizes = [1, 8, 8, 128], strides = [1, 1, 1, 1]} : vector<4x9x9x128xf32> to vector<1x8x8x128xf32>
    %53 = vector.shape_cast %52 : vector<1x8x8x128xf32> to vector<8x8x128xf32>
    %54 = vector.shape_cast %53 : vector<8x8x128xf32> to vector<64x128xf32>
    %55 = arith.truncf %54 : vector<64x128xf32> to vector<64x128xbf16>
    %c4 = arith.constant 4 : index
    %c0_26 = arith.constant 0 : index
    %c0_27 = arith.constant 0 : index
    %56 = vector.load %arg5[%c4, %c0_26, %c0_27] : memref<9x128x128xbf16, #tpu.memory_space<vmem>>, vector<1x128x128xbf16>
    %57 = vector.shape_cast %56 : vector<1x128x128xbf16> to vector<128x128xbf16>
    %cst_28 = arith.constant dense<0.000000e+00> : vector<64x128xf32>
    %58 = tpu.matmul %55, %57, %cst_28 {dimension_numbers = #tpu.dot_dimension_numbers<[1], [0], [0], [1], [0, 0, 1, 1], [], []>} : vector<64x128xbf16>, vector<128x128xbf16>, vector<64x128xf32> -> vector<64x128xf32>
    %59 = arith.addf %51, %58 : vector<64x128xf32>
    %60 = vector.extract_strided_slice %18 {offsets = [2, 0, 1, 0], sizes = [1, 8, 8, 128], strides = [1, 1, 1, 1]} : vector<4x9x9x128xf32> to vector<1x8x8x128xf32>
    %61 = vector.shape_cast %60 : vector<1x8x8x128xf32> to vector<8x8x128xf32>
    %62 = vector.shape_cast %61 : vector<8x8x128xf32> to vector<64x128xf32>
    %63 = arith.truncf %62 : vector<64x128xf32> to vector<64x128xbf16>
    %c5 = arith.constant 5 : index
    %c0_29 = arith.constant 0 : index
    %c0_30 = arith.constant 0 : index
    %64 = vector.load %arg5[%c5, %c0_29, %c0_30] : memref<9x128x128xbf16, #tpu.memory_space<vmem>>, vector<1x128x128xbf16>
    %65 = vector.shape_cast %64 : vector<1x128x128xbf16> to vector<128x128xbf16>
    %cst_31 = arith.constant dense<0.000000e+00> : vector<64x128xf32>
    %66 = tpu.matmul %63, %65, %cst_31 {dimension_numbers = #tpu.dot_dimension_numbers<[1], [0], [0], [1], [0, 0, 1, 1], [], []>} : vector<64x128xbf16>, vector<128x128xbf16>, vector<64x128xf32> -> vector<64x128xf32>
    %67 = arith.addf %59, %66 : vector<64x128xf32>
    %68 = vector.extract_strided_slice %18 {offsets = [0, 1, 0, 0], sizes = [1, 8, 8, 128], strides = [1, 1, 1, 1]} : vector<4x9x9x128xf32> to vector<1x8x8x128xf32>
    %69 = vector.shape_cast %68 : vector<1x8x8x128xf32> to vector<8x8x128xf32>
    %70 = vector.shape_cast %69 : vector<8x8x128xf32> to vector<64x128xf32>
    %71 = arith.truncf %70 : vector<64x128xf32> to vector<64x128xbf16>
    %c6 = arith.constant 6 : index
    %c0_32 = arith.constant 0 : index
    %c0_33 = arith.constant 0 : index
    %72 = vector.load %arg5[%c6, %c0_32, %c0_33] : memref<9x128x128xbf16, #tpu.memory_space<vmem>>, vector<1x128x128xbf16>
    %73 = vector.shape_cast %72 : vector<1x128x128xbf16> to vector<128x128xbf16>
    %cst_34 = arith.constant dense<0.000000e+00> : vector<64x128xf32>
    %74 = tpu.matmul %71, %73, %cst_34 {dimension_numbers = #tpu.dot_dimension_numbers<[1], [0], [0], [1], [0, 0, 1, 1], [], []>} : vector<64x128xbf16>, vector<128x128xbf16>, vector<64x128xf32> -> vector<64x128xf32>
    %75 = arith.addf %67, %74 : vector<64x128xf32>
    %76 = vector.extract_strided_slice %18 {offsets = [1, 1, 0, 0], sizes = [1, 8, 8, 128], strides = [1, 1, 1, 1]} : vector<4x9x9x128xf32> to vector<1x8x8x128xf32>
    %77 = vector.shape_cast %76 : vector<1x8x8x128xf32> to vector<8x8x128xf32>
    %78 = vector.shape_cast %77 : vector<8x8x128xf32> to vector<64x128xf32>
    %79 = arith.truncf %78 : vector<64x128xf32> to vector<64x128xbf16>
    %c7 = arith.constant 7 : index
    %c0_35 = arith.constant 0 : index
    %c0_36 = arith.constant 0 : index
    %80 = vector.load %arg5[%c7, %c0_35, %c0_36] : memref<9x128x128xbf16, #tpu.memory_space<vmem>>, vector<1x128x128xbf16>
    %81 = vector.shape_cast %80 : vector<1x128x128xbf16> to vector<128x128xbf16>
    %cst_37 = arith.constant dense<0.000000e+00> : vector<64x128xf32>
    %82 = tpu.matmul %79, %81, %cst_37 {dimension_numbers = #tpu.dot_dimension_numbers<[1], [0], [0], [1], [0, 0, 1, 1], [], []>} : vector<64x128xbf16>, vector<128x128xbf16>, vector<64x128xf32> -> vector<64x128xf32>
    %83 = arith.addf %75, %82 : vector<64x128xf32>
    %84 = vector.extract_strided_slice %18 {offsets = [0, 1, 1, 0], sizes = [1, 8, 8, 128], strides = [1, 1, 1, 1]} : vector<4x9x9x128xf32> to vector<1x8x8x128xf32>
    %85 = vector.shape_cast %84 : vector<1x8x8x128xf32> to vector<8x8x128xf32>
    %86 = vector.shape_cast %85 : vector<8x8x128xf32> to vector<64x128xf32>
    %87 = arith.truncf %86 : vector<64x128xf32> to vector<64x128xbf16>
    %c8 = arith.constant 8 : index
    %c0_38 = arith.constant 0 : index
    %c0_39 = arith.constant 0 : index
    %88 = vector.load %arg5[%c8, %c0_38, %c0_39] : memref<9x128x128xbf16, #tpu.memory_space<vmem>>, vector<1x128x128xbf16>
    %89 = vector.shape_cast %88 : vector<1x128x128xbf16> to vector<128x128xbf16>
    %cst_40 = arith.constant dense<0.000000e+00> : vector<64x128xf32>
    %90 = tpu.matmul %87, %89, %cst_40 {dimension_numbers = #tpu.dot_dimension_numbers<[1], [0], [0], [1], [0, 0, 1, 1], [], []>} : vector<64x128xbf16>, vector<128x128xbf16>, vector<64x128xf32> -> vector<64x128xf32>
    %91 = arith.addf %83, %90 : vector<64x128xf32>
    %c0_41 = arith.constant 0 : index
    %c0_42 = arith.constant 0 : index
    %92 = vector.load %arg6[%c0_41, %c0_42] : memref<1x128xf32, #tpu.memory_space<vmem>>, vector<1x128xf32>
    %93 = vector.shape_cast %92 : vector<1x128xf32> to vector<128xf32>
    %94 = vector.shape_cast %93 : vector<128xf32> to vector<1x128xf32>
    %95 = vector.broadcast %94 : vector<1x128xf32> to vector<64x128xf32>
    %96 = arith.mulf %91, %95 : vector<64x128xf32>
    %c0_43 = arith.constant 0 : index
    %c0_44 = arith.constant 0 : index
    %97 = vector.load %arg7[%c0_43, %c0_44] : memref<1x128xf32, #tpu.memory_space<vmem>>, vector<1x128xf32>
    %98 = vector.shape_cast %97 : vector<1x128xf32> to vector<128xf32>
    %99 = vector.shape_cast %98 : vector<128xf32> to vector<1x128xf32>
    %100 = vector.broadcast %99 : vector<1x128xf32> to vector<64x128xf32>
    %101 = arith.addf %96, %100 : vector<64x128xf32>
    %cst_45 = arith.constant 0.000000e+00 : f32
    %102 = vector.broadcast %cst_45 : f32 to vector<64x128xf32>
    %103 = arith.cmpf oge, %101, %102 : vector<64x128xf32>
    %cst_46 = arith.constant 0.00999999977 : f32
    %104 = vector.broadcast %cst_46 : f32 to vector<64x128xf32>
    %105 = arith.mulf %104, %101 : vector<64x128xf32>
    %106 = arith.select %103, %101, %105 : vector<64x128xi1>, vector<64x128xf32>
    %107 = vector.shape_cast %106 : vector<64x128xf32> to vector<1x8x8x128xf32>
    %c0_47 = arith.constant 0 : index
    %c0_48 = arith.constant 0 : index
    %c0_49 = arith.constant 0 : index
    %c0_50 = arith.constant 0 : index
    %108 = vector.load %arg8[%c0_47, %c0_48, %c0_49, %c0_50] : memref<1x8x8x128xf32, #tpu.memory_space<vmem>>, vector<1x8x8x128xf32>
    tpu.vector_store %arg8[%c0_47, %c0_48, %c0_49, %c0_50], %107 {strides = array<i32>} : memref<1x8x8x128xf32, #tpu.memory_space<vmem>>, vector<1x8x8x128xf32>,
    return
  }
  func.func @transform_0(%arg0: i32) -> (i32, i32, i32, i32) {
    %c0_i32 = arith.constant 0 : i32
    %c0_i32_0 = arith.constant 0 : i32
    %c0_i32_1 = arith.constant 0 : i32
    %c0_i32_2 = arith.constant 0 : i32
    return %arg0, %c0_i32, %c0_i32_0, %c0_i32_1 : i32, i32, i32, i32
  }
  func.func @transform_1(%arg0: i32) -> (i32, i32, i32, i32) {
    %c0_i32 = arith.constant 0 : i32
    %c0_i32_0 = arith.constant 0 : i32
    %c0_i32_1 = arith.constant 0 : i32
    %c0_i32_2 = arith.constant 0 : i32
    %c0_i32_3 = arith.constant 0 : i32
    return %c0_i32, %c0_i32_0, %c0_i32_1, %c0_i32_2 : i32, i32, i32, i32
  }
  func.func @transform_2(%arg0: i32) -> (i32, i32) {
    %c0_i32 = arith.constant 0 : i32
    %c0_i32_0 = arith.constant 0 : i32
    %c0_i32_1 = arith.constant 0 : i32
    return %c0_i32, %c0_i32_0 : i32, i32
  }
  func.func @transform_3(%arg0: i32) -> (i32, i32) {
    %c0_i32 = arith.constant 0 : i32
    %c0_i32_0 = arith.constant 0 : i32
    %c0_i32_1 = arith.constant 0 : i32
    return %c0_i32, %c0_i32_0 : i32, i32
  }
  func.func @transform_4(%arg0: i32) -> (i32, i32, i32) {
    %c0_i32 = arith.constant 0 : i32
    %c0_i32_0 = arith.constant 0 : i32
    %c0_i32_1 = arith.constant 0 : i32
    %c0_i32_2 = arith.constant 0 : i32
    return %c0_i32, %c0_i32_0, %c0_i32_1 : i32, i32, i32
  }
  func.func @transform_5(%arg0: i32) -> (i32, i32) {
    %c0_i32 = arith.constant 0 : i32
    %c0_i32_0 = arith.constant 0 : i32
    %c0_i32_1 = arith.constant 0 : i32
    return %c0_i32, %c0_i32_0 : i32, i32
  }
  func.func @transform_6(%arg0: i32) -> (i32, i32) {
    %c0_i32 = arith.constant 0 : i32
    %c0_i32_0 = arith.constant 0 : i32
    %c0_i32_1 = arith.constant 0 : i32
    return %c0_i32, %c0_i32_0 : i32, i32
  }
  func.func @transform_7(%arg0: i32) -> (i32, i32, i32, i32) {
    %c0_i32 = arith.constant 0 : i32
    %c0_i32_0 = arith.constant 0 : i32
    %c0_i32_1 = arith.constant 0 : i32
    %c0_i32_2 = arith.constant 0 : i32
    return %arg0, %c0_i32, %c0_i32_0, %c0_i32_1 : i32, i32, i32, i32
  }
}

</mosaic_0001>

<llo_original>
// kernel: tpu_custom_call.1
$region0: #{tpu_custom_call.1}
  #allocation0 [shape = 'u32[]', space=smem, size = 0x4, offset = 0x4, fixed_abs, tag = 'smem constant byte address 0x4 - core index']
  #allocation1 [shape = 'u32[72,128]{1,0:T(1,128)}', space=vmem, size = 0x9000, scoped, tag = 'internal scratch']
  %s0 = inlined_call_operand.vmem [shape: f32[8,9,9,128], index: 0, kind: input, shape index: {}]
  %s1 = inlined_call_operand.vmem [shape: f32[4,9,9,1], index: 1, kind: input, shape index: {}]
  %s2 = inlined_call_operand.vmem [shape: f32[1,128], index: 2, kind: input, shape index: {}]
  %s3 = inlined_call_operand.vmem [shape: f32[1,128], index: 3, kind: input, shape index: {}]
  %s4 = inlined_call_operand.vmem [shape: bf16[9,128,128], index: 4, kind: input, shape index: {}]
  %s5 = inlined_call_operand.vmem [shape: f32[1,128], index: 5, kind: input, shape index: {}]
  %s6 = inlined_call_operand.vmem [shape: f32[1,128], index: 6, kind: input, shape index: {}]
  %s7 = inlined_call_operand.hbm [shape: f32[2,8,8,128], index: 7, kind: output, shape index: {}]
  %s8 = sld [smem:[#allocation0]]
  $region61: #{tpu_custom_call.1} parent=0
    _
  %s10 = ssub.s32 1, %s8
  %s11 = scalar_select 0, %s10, %s8
  $region1: #{tpu_custom_call.1} parent=0
    #allocation2 [shape = 'u8[65536]{0}', space=vmem, size = 0x10000, scoped, tag = 'output window, operand 0']
    #allocation3 [shape = 's32[2]{0}', space=sflag, size = 0x8, scoped, tag = 'scoped memory for tpu_custom_call.1']
    %12 = vsyncpa [#allocation3], 0
    %s13 = scalar_lea.sflag [#allocation3], 1
    %14 = vsyncpa %s13, 0
    loop: start=0, step=1, limit=4
    $region2: #{tpu_custom_call.1} parent=1 // loop_pre_header
      _
    $region3: #{tpu_custom_call.1} parent=1 // loop_header
      %s16 = sphi 0, %s20
      %p17 = scmp.ge.s32.totalorder %s16, 4
      %s26 = sphi 0, %s28
      %s29 = sphi 0, %s26
      %s30 = sphi 0, %s29
      %s46 = sphi 0, %s30
      %s50 = sphi 0, %s50
      %s52 = sphi 0, %s50
      %s53 = sphi 0, %s52
      %s67 = sphi 0, %s53
      %s71 = sphi 0, %s71
      %s73 = sphi 0, %s71
      %s74 = sphi 0, %s73
      %s88 = sphi 0, %s74
      %s92 = sphi 0, %s92
      %s94 = sphi 0, %s92
      %s95 = sphi 0, %s94
      %s109 = sphi 0, %s95
      %s113 = sphi 0, %s113
      %s115 = sphi 0, %s113
      %s116 = sphi 0, %s115
      %s130 = sphi 0, %s116
      %s134 = sphi 0, %s134
      %s136 = sphi 0, %s134
      %s137 = sphi 0, %s136
      %s151 = sphi 0, %s137
      %s155 = sphi 0, %s155
      %s157 = sphi 0, %s155
      %s158 = sphi 0, %s157
      %s172 = sphi 0, %s158
      %s178 = sphi 0, %s180
      %s181 = sphi 0, %s178
      %s182 = sphi 0, %s181
      %s198 = sphi 0, %s182
    $region4: #{tpu_custom_call.1} parent=1 // loop_header_branch
      %19 = sbr.rel (%p17) target = $region8
    $region5: #{tpu_custom_call.1} parent=1 // loop_body
      %s21 = ssub.s32 %s16, 1
      %s22 = ssub.s32 %s16, 2
      %s23 = sadd.s32 %s16, 1
      %s24 = ssub.s32 %s16, %s23
      %p25 = scmp.eq.s32.totalorder %s24, 0
      %s27 = sadd.s32 %s26, 1
      %s28 = scalar_select %p25, %s26, %s27
      %p31 = pneg %p25
      %p32 = scmp.eq.s32.totalorder %s16, 1
      %p33 = por %p31, %p32
      %p34 = scmp.ne.s32.totalorder %s26, %s29
      %p35 = scmp.eq.s32.totalorder %s16, 0
      %p36 = por %p34, %p35
      %p37 = scmp.ne.s32.totalorder %s26, %s29
      %p38 = scmp.eq.s32.totalorder %s21, 1
      %p39 = por %p37, %p38
      %p40 = scmp.ne.s32.totalorder %s29, %s30
      %p41 = scmp.eq.s32.totalorder %s21, 0
      %p42 = por %p40, %p41
      %p43 = scmp.ne.s32.totalorder %s29, %s30
      %p44 = scmp.eq.s32.totalorder %s22, 1
      %p45 = por %p43, %p44
      %p47 = scmp.ne.s32.totalorder %s30, %s46
      %p48 = scmp.eq.s32.totalorder %s22, 0
      %p49 = por %p47, %p48
      %s51 = sadd.s32 %s50, 1
      %p54 = scmp.eq.s32.totalorder %s16, 1
      %p55 = scmp.ne.s32.totalorder %s50, %s52
      %p56 = scmp.eq.s32.totalorder %s16, 0
      %p57 = por %p55, %p56
      %p58 = scmp.ne.s32.totalorder %s50, %s52
      %p59 = scmp.eq.s32.totalorder %s21, 1
      %p60 = por %p58, %p59
      %p61 = scmp.ne.s32.totalorder %s52, %s53
      %p62 = scmp.eq.s32.totalorder %s21, 0
      %p63 = por %p61, %p62
      %p64 = scmp.ne.s32.totalorder %s52, %s53
      %p65 = scmp.eq.s32.totalorder %s22, 1
      %p66 = por %p64, %p65
      %p68 = scmp.ne.s32.totalorder %s53, %s67
      %p69 = scmp.eq.s32.totalorder %s22, 0
      %p70 = por %p68, %p69
      %s72 = sadd.s32 %s71, 1
      %p75 = scmp.eq.s32.totalorder %s16, 1
      %p76 = scmp.ne.s32.totalorder %s71, %s73
      %p77 = scmp.eq.s32.totalorder %s16, 0
      %p78 = por %p76, %p77
      %p79 = scmp.ne.s32.totalorder %s71, %s73
      %p80 = scmp.eq.s32.totalorder %s21, 1
      %p81 = por %p79, %p80
      %p82 = scmp.ne.s32.totalorder %s73, %s74
      %p83 = scmp.eq.s32.totalorder %s21, 0
      %p84 = por %p82, %p83
      %p85 = scmp.ne.s32.totalorder %s73, %s74
      %p86 = scmp.eq.s32.totalorder %s22, 1
      %p87 = por %p85, %p86
      %p89 = scmp.ne.s32.totalorder %s74, %s88
      %p90 = scmp.eq.s32.totalorder %s22, 0
      %p91 = por %p89, %p90
      %s93 = sadd.s32 %s92, 1
      %p96 = scmp.eq.s32.totalorder %s16, 1
      %p97 = scmp.ne.s32.totalorder %s92, %s94
      %p98 = scmp.eq.s32.totalorder %s16, 0
      %p99 = por %p97, %p98
      %p100 = scmp.ne.s32.totalorder %s92, %s94
      %p101 = scmp.eq.s32.totalorder %s21, 1
      %p102 = por %p100, %p101
      %p103 = scmp.ne.s32.totalorder %s94, %s95
      %p104 = scmp.eq.s32.totalorder %s21, 0
      %p105 = por %p103, %p104
      %p106 = scmp.ne.s32.totalorder %s94, %s95
      %p107 = scmp.eq.s32.totalorder %s22, 1
      %p108 = por %p106, %p107
      %p110 = scmp.ne.s32.totalorder %s95, %s109
      %p111 = scmp.eq.s32.totalorder %s22, 0
      %p112 = por %p110, %p111
      %s114 = sadd.s32 %s113, 1
      %p117 = scmp.eq.s32.totalorder %s16, 1
      %p118 = scmp.ne.s32.totalorder %s113, %s115
      %p119 = scmp.eq.s32.totalorder %s16, 0
      %p120 = por %p118, %p119
      %p121 = scmp.ne.s32.totalorder %s113, %s115
      %p122 = scmp.eq.s32.totalorder %s21, 1
      %p123 = por %p121, %p122
      %p124 = scmp.ne.s32.totalorder %s115, %s116
      %p125 = scmp.eq.s32.totalorder %s21, 0
      %p126 = por %p124, %p125
      %p127 = scmp.ne.s32.totalorder %s115, %s116
      %p128 = scmp.eq.s32.totalorder %s22, 1
      %p129 = por %p127, %p128
      %p131 = scmp.ne.s32.totalorder %s116, %s130
      %p132 = scmp.eq.s32.totalorder %s22, 0
      %p133 = por %p131, %p132
      %s135 = sadd.s32 %s134, 1
      %p138 = scmp.eq.s32.totalorder %s16, 1
      %p139 = scmp.ne.s32.totalorder %s134, %s136
      %p140 = scmp.eq.s32.totalorder %s16, 0
      %p141 = por %p139, %p140
      %p142 = scmp.ne.s32.totalorder %s134, %s136
      %p143 = scmp.eq.s32.totalorder %s21, 1
      %p144 = por %p142, %p143
      %p145 = scmp.ne.s32.totalorder %s136, %s137
      %p146 = scmp.eq.s32.totalorder %s21, 0
      %p147 = por %p145, %p146
      %p148 = scmp.ne.s32.totalorder %s136, %s137
      %p149 = scmp.eq.s32.totalorder %s22, 1
      %p150 = por %p148, %p149
      %p152 = scmp.ne.s32.totalorder %s137, %s151
      %p153 = scmp.eq.s32.totalorder %s22, 0
      %p154 = por %p152, %p153
      %s156 = sadd.s32 %s155, 1
      %p159 = scmp.eq.s32.totalorder %s16, 1
      %p160 = scmp.ne.s32.totalorder %s155, %s157
      %p161 = scmp.eq.s32.totalorder %s16, 0
      %p162 = por %p160, %p161
      %p163 = scmp.ne.s32.totalorder %s155, %s157
      %p164 = scmp.eq.s32.totalorder %s21, 1
      %p165 = por %p163, %p164
      %p166 = scmp.ne.s32.totalorder %s157, %s158
      %p167 = scmp.eq.s32.totalorder %s21, 0
      %p168 = por %p166, %p167
      %p169 = scmp.ne.s32.totalorder %s157, %s158
      %p170 = scmp.eq.s32.totalorder %s22, 1
      %p171 = por %p169, %p170
      %p173 = scmp.ne.s32.totalorder %s158, %s172
      %p174 = scmp.eq.s32.totalorder %s22, 0
      %p175 = por %p173, %p174
      %s176 = ssub.s32 %s16, %s23
      %p177 = scmp.eq.s32.totalorder %s176, 0
      %s179 = sadd.s32 %s178, 1
      %s180 = scalar_select %p177, %s178, %s179
      %p183 = pneg %p177
      %p184 = scmp.eq.s32.totalorder %s16, 1
      %p185 = por %p183, %p184
      %p186 = scmp.ne.s32.totalorder %s178, %s181
      %p187 = scmp.eq.s32.totalorder %s16, 0
      %p188 = por %p186, %p187
      %p189 = scmp.ne.s32.totalorder %s178, %s181
      %p190 = scmp.eq.s32.totalorder %s21, 1
      %p191 = por %p189, %p190
      %p192 = scmp.ne.s32.totalorder %s181, %s182
      %p193 = scmp.eq.s32.totalorder %s21, 0
      %p194 = por %p192, %p193
      %p195 = scmp.ne.s32.totalorder %s181, %s182
      %p196 = scmp.eq.s32.totalorder %s22, 1
      %p197 = por %p195, %p196
      %p199 = scmp.ne.s32.totalorder %s182, %s198
      %p200 = scmp.eq.s32.totalorder %s22, 0
      %p201 = por %p199, %p200
      %p202 = scmp.le.s32.totalorder 1, %s16
      %p203 = scmp.lt.s32.totalorder %s16, 3
      %p204 = pnand %p202, %p203
      %p205 = pneg %p204
      // Predicated region
      $region9: #{tpu_custom_call.1} parent=5 // pred_check
        _
      $region10: #{tpu_custom_call.1} parent=5 // pred_check_branch
        %207 = sbr.rel (%p204) target = $region12
      $region11: #{tpu_custom_call.1} parent=5 // pred_region
        %s208 = ssub.s32 %s16, 1
        // Predicated region
        $region13: #{tpu_custom_call.1} parent=11 // pred_check
          %p209 = pneg %p63
        $region14: #{tpu_custom_call.1} parent=11 // pred_check_branch
          %211 = sbr.rel (%p209) target = $region16
        $region15: #{tpu_custom_call.1} parent=11 // pred_region
          _
        $region16: #{tpu_custom_call.1} parent=11 // pred_fallthru
          _
        // Predicated region
        $region17: #{tpu_custom_call.1} parent=11 // pred_check
          %p212 = pneg %p84
        $region18: #{tpu_custom_call.1} parent=11 // pred_check_branch
          %214 = sbr.rel (%p212) target = $region20
        $region19: #{tpu_custom_call.1} parent=11 // pred_region
          _
        $region20: #{tpu_custom_call.1} parent=11 // pred_fallthru
          _
        // Predicated region
        $region21: #{tpu_custom_call.1} parent=11 // pred_check
          %p215 = pneg %p105
        $region22: #{tpu_custom_call.1} parent=11 // pred_check_branch
          %217 = sbr.rel (%p215) target = $region24
        $region23: #{tpu_custom_call.1} parent=11 // pred_region
          _
        $region24: #{tpu_custom_call.1} parent=11 // pred_fallthru
          _
        // Predicated region
        $region25: #{tpu_custom_call.1} parent=11 // pred_check
          %p218 = pneg %p126
        $region26: #{tpu_custom_call.1} parent=11 // pred_check_branch
          %220 = sbr.rel (%p218) target = $region28
        $region27: #{tpu_custom_call.1} parent=11 // pred_region
          _
        $region28: #{tpu_custom_call.1} parent=11 // pred_fallthru
          _
        // Predicated region
        $region29: #{tpu_custom_call.1} parent=11 // pred_check
          %p221 = pneg %p147
        $region30: #{tpu_custom_call.1} parent=11 // pred_check_branch
          %223 = sbr.rel (%p221) target = $region32
        $region31: #{tpu_custom_call.1} parent=11 // pred_region
          _
        $region32: #{tpu_custom_call.1} parent=11 // pred_fallthru
          _
        // Predicated region
        $region33: #{tpu_custom_call.1} parent=11 // pred_check
          %p224 = pneg %p168
        $region34: #{tpu_custom_call.1} parent=11 // pred_check_branch
          %226 = sbr.rel (%p224) target = $region36
        $region35: #{tpu_custom_call.1} parent=11 // pred_region
          _
        $region36: #{tpu_custom_call.1} parent=11 // pred_fallthru
          _
      $region12: #{tpu_custom_call.1} parent=5 // pred_fallthru
        _
      %p227 = scmp.lt.s32.totalorder %s16, 2
      // Predicated region
      $region37: #{tpu_custom_call.1} parent=5 // pred_check
        %p228 = pneg %p227
      $region38: #{tpu_custom_call.1} parent=5 // pred_check_branch
        %230 = sbr.rel (%p228) target = $region40
      $region39: #{tpu_custom_call.1} parent=5 // pred_region
        // Predicated region
        $region41: #{tpu_custom_call.1} parent=39 // pred_check
          %p231 = pneg %p36
        $region42: #{tpu_custom_call.1} parent=39 // pred_check_branch
          %233 = sbr.rel (%p231) target = $region44
        $region43: #{tpu_custom_call.1} parent=39 // pred_region
          %s234 = smul.u32 4, %s16
          %p235 = scmp.lt.s32.totalorder %s234, 7
          %s236 = scalar_select %p235, %s234, 7
          %s237 = smul.addr %s236, 18
          %s238 = smul.addr %s237, 8
          %s239 = scalar_lea.vmem %s0, %s238
          %s240 = smul.u32 4, %s16
        $region44: #{tpu_custom_call.1} parent=39 // pred_fallthru
          _
      $region40: #{tpu_custom_call.1} parent=5 // pred_fallthru
        _
      %p241 = scmp.le.s32.totalorder 1, %s16
      %p242 = scmp.lt.s32.totalorder %s16, 3
      %p243 = pnand %p241, %p242
      %p244 = pneg %p243
      // Predicated region
      $region45: #{tpu_custom_call.1} parent=5 // pred_check
        _
      $region46: #{tpu_custom_call.1} parent=5 // pred_check_branch
        %246 = sbr.rel (%p243) target = $region48
      $region47: #{tpu_custom_call.1} parent=5 // pred_region
        %s247 = ssub.s32 %s16, 1
        %s248 = smul.u32 4, %s21
        %p249 = scmp.lt.s32.totalorder %s248, 7
        %s250 = scalar_select %p249, %s248, 7
        %s251 = smul.addr %s250, 18
        %s252 = smul.addr %s251, 8
        %s253 = scalar_lea.vmem %s0, %s252
        %p254 = pneg %p42
        %p255 = pneg %p39
        %p256 = pneg %p63
        %p257 = pneg %p60
        %p258 = pneg %p84
        %p259 = pneg %p81
        %p260 = pneg %p105
        %p261 = pneg %p102
        %p262 = pneg %p126
        %p263 = pneg %p123
        %p264 = pneg %p147
        %p265 = pneg %p144
        %p266 = pneg %p168
        %p267 = pneg %p165
        %p268 = pneg %p194
        %p269 = pneg %p191
        %s270 = sand.u32 %s181, 1
        %s271 = scalar_lea.sflag [#allocation3], %s270
        %s272 = sand.u32 %s181, 1
        %s273 = smul.addr %s272, 64
        %s274 = scalar_lea.vmem [#allocation2], %s273
        %s275 = smul.u32 4, %s21
        %p276 = scmp.lt.s32.totalorder %s275, 7
        %s277 = scalar_select %p276, %s275, 7
        %s278 = smul.addr %s277, 18
        %s279 = smul.addr %s278, 8
        %s280 = scalar_lea.vmem %s0, %s279
        %s281 = smul.u32 4, %s21
        %v282 = vld [vmem:[%s280] sm:$0xff]
        %v283 = vld [vmem:[%s280 + $0x8] sm:$0x1]
        %v284 = vld [vmem:[%s280 + $0x10] sm:$0xff]
        %v285 = vld [vmem:[%s280 + $0x18] sm:$0x1]
        %v286 = vld [vmem:[%s280 + $0x20] sm:$0xff]
        %v287 = vld [vmem:[%s280 + $0x28] sm:$0x1]
        %v288 = vld [vmem:[%s280 + $0x30] sm:$0xff]
        %v289 = vld [vmem:[%s280 + $0x38] sm:$0x1]
        %v290 = vld [vmem:[%s280 + $0x40] sm:$0xff]
        %v291 = vld [vmem:[%s280 + $0x48] sm:$0x1]
        %v292 = vld [vmem:[%s280 + $0x50] sm:$0xff]
        %v293 = vld [vmem:[%s280 + $0x58] sm:$0x1]
        %v294 = vld [vmem:[%s280 + $0x60] sm:$0xff]
        %v295 = vld [vmem:[%s280 + $0x68] sm:$0x1]
        %v296 = vld [vmem:[%s280 + $0x70] sm:$0xff]
        %v297 = vld [vmem:[%s280 + $0x78] sm:$0x1]
        %v298 = vld [vmem:[%s280 + $0x80] sm:$0xff]
        %v299 = vld [vmem:[%s280 + $0x88] sm:$0x1]
        %v300 = vld [vmem:[%s280 + $0x90] sm:$0xff]
        %v301 = vld [vmem:[%s280 + $0xa0] sm:$0xff]
        %v302 = vld [vmem:[%s280 + $0xb0] sm:$0xff]
        %v303 = vld [vmem:[%s280 + $0xc0] sm:$0xff]
        %v304 = vld [vmem:[%s280 + $0xd0] sm:$0xff]
        %v305 = vld [vmem:[%s280 + $0xe0] sm:$0xff]
        %v306 = vld [vmem:[%s280 + $0xf0] sm:$0xff]
        %v307 = vld [vmem:[%s280 + $0x100] sm:$0xff]
        %v308 = vld [vmem:[%s280 + $0x110] sm:$0xff]
        %v309 = vld [vmem:[%s280 + $0x120] sm:$0xff]
        %v310 = vld [vmem:[%s280 + $0x128] sm:$0x1]
        %v311 = vld [vmem:[%s280 + $0x130] sm:$0xff]
        %v312 = vld [vmem:[%s280 + $0x138] sm:$0x1]
        %v313 = vld [vmem:[%s280 + $0x140] sm:$0xff]
        %v314 = vld [vmem:[%s280 + $0x148] sm:$0x1]
        %v315 = vld [vmem:[%s280 + $0x150] sm:$0xff]
        %v316 = vld [vmem:[%s280 + $0x158] sm:$0x1]
        %v317 = vld [vmem:[%s280 + $0x160] sm:$0xff]
        %v318 = vld [vmem:[%s280 + $0x168] sm:$0x1]
        %v319 = vld [vmem:[%s280 + $0x170] sm:$0xff]
        %v320 = vld [vmem:[%s280 + $0x178] sm:$0x1]
        %v321 = vld [vmem:[%s280 + $0x180] sm:$0xff]
        %v322 = vld [vmem:[%s280 + $0x188] sm:$0x1]
        %v323 = vld [vmem:[%s280 + $0x190] sm:$0xff]
        %v324 = vld [vmem:[%s280 + $0x198] sm:$0x1]
        %v325 = vld [vmem:[%s280 + $0x1b0] sm:$0xff]
        %v326 = vld [vmem:[%s280 + $0x1c0] sm:$0xff]
        %v327 = vld [vmem:[%s280 + $0x1d0] sm:$0xff]
        %v328 = vld [vmem:[%s280 + $0x1e0] sm:$0xff]
        %v329 = vld [vmem:[%s280 + $0x1f0] sm:$0xff]
        %v330 = vld [vmem:[%s280 + $0x200] sm:$0xff]
        %v331 = vld [vmem:[%s280 + $0x210] sm:$0xff]
        %v332 = vld [vmem:[%s280 + $0x220] sm:$0xff]
        %v333 = vld [vmem:[%s2] sm:$0x1]
        %v335 = vperm.slane %v333, 0
        %v337 = vmul.f32 %v282, %v335
        %v338 = vmul.f32 %v283, %v335
        %v339 = vmul.f32 %v284, %v335
        %v340 = vmul.f32 %v285, %v335
        %v341 = vmul.f32 %v286, %v335
        %v342 = vmul.f32 %v287, %v335
        %v343 = vmul.f32 %v288, %v335
        %v344 = vmul.f32 %v289, %v335
        %v345 = vmul.f32 %v290, %v335
        %v346 = vmul.f32 %v291, %v335
        %v347 = vmul.f32 %v292, %v335
        %v348 = vmul.f32 %v293, %v335
        %v349 = vmul.f32 %v294, %v335
        %v350 = vmul.f32 %v295, %v335
        %v351 = vmul.f32 %v296, %v335
        %v352 = vmul.f32 %v297, %v335
        %v353 = vmul.f32 %v298, %v335
        %v354 = vmul.f32 %v299, %v335
        %v355 = vmul.f32 %v300, %v335
        %v356 = vmul.f32 %v301, %v335
        %v357 = vmul.f32 %v302, %v335
        %v358 = vmul.f32 %v303, %v335
        %v359 = vmul.f32 %v304, %v335
        %v360 = vmul.f32 %v305, %v335
        %v361 = vmul.f32 %v306, %v335
        %v362 = vmul.f32 %v307, %v335
        %v363 = vmul.f32 %v308, %v335
        %v364 = vmul.f32 %v309, %v335
        %v365 = vmul.f32 %v310, %v335
        %v366 = vmul.f32 %v311, %v335
        %v367 = vmul.f32 %v312, %v335
        %v368 = vmul.f32 %v313, %v335
        %v369 = vmul.f32 %v314, %v335
        %v370 = vmul.f32 %v315, %v335
        %v371 = vmul.f32 %v316, %v335
        %v372 = vmul.f32 %v317, %v335
        %v373 = vmul.f32 %v318, %v335
        %v374 = vmul.f32 %v319, %v335
        %v375 = vmul.f32 %v320, %v335
        %v376 = vmul.f32 %v321, %v335
        %v377 = vmul.f32 %v322, %v335
        %v378 = vmul.f32 %v323, %v335
        %v379 = vmul.f32 %v324, %v335
        %v380 = vmul.f32 %v325, %v335
        %v381 = vmul.f32 %v326, %v335
        %v382 = vmul.f32 %v327, %v335
        %v383 = vmul.f32 %v328, %v335
        %v384 = vmul.f32 %v329, %v335
        %v385 = vmul.f32 %v330, %v335
        %v386 = vmul.f32 %v331, %v335
        %v387 = vmul.f32 %v332, %v335
        %v388 = vld [vmem:[%s3] sm:$0x1]
        %v390 = vperm.slane %v388, 0
        %v392 = vadd.f32 %v337, %v390
        %v393 = vadd.f32 %v338, %v390
        %v394 = vadd.f32 %v339, %v390
        %v395 = vadd.f32 %v340, %v390
        %v396 = vadd.f32 %v341, %v390
        %v397 = vadd.f32 %v342, %v390
        %v398 = vadd.f32 %v343, %v390
        %v399 = vadd.f32 %v344, %v390
        %v400 = vadd.f32 %v345, %v390
        %v401 = vadd.f32 %v346, %v390
        %v402 = vadd.f32 %v347, %v390
        %v403 = vadd.f32 %v348, %v390
        %v404 = vadd.f32 %v349, %v390
        %v405 = vadd.f32 %v350, %v390
        %v406 = vadd.f32 %v351, %v390
        %v407 = vadd.f32 %v352, %v390
        %v408 = vadd.f32 %v353, %v390
        %v409 = vadd.f32 %v354, %v390
        %v410 = vadd.f32 %v355, %v390
        %v411 = vadd.f32 %v356, %v390
        %v412 = vadd.f32 %v357, %v390
        %v413 = vadd.f32 %v358, %v390
        %v414 = vadd.f32 %v359, %v390
        %v415 = vadd.f32 %v360, %v390
        %v416 = vadd.f32 %v361, %v390
        %v417 = vadd.f32 %v362, %v390
        %v418 = vadd.f32 %v363, %v390
        %v419 = vadd.f32 %v364, %v390
        %v420 = vadd.f32 %v365, %v390
        %v421 = vadd.f32 %v366, %v390
        %v422 = vadd.f32 %v367, %v390
        %v423 = vadd.f32 %v368, %v390
        %v424 = vadd.f32 %v369, %v390
        %v425 = vadd.f32 %v370, %v390
        %v426 = vadd.f32 %v371, %v390
        %v427 = vadd.f32 %v372, %v390
        %v428 = vadd.f32 %v373, %v390
        %v429 = vadd.f32 %v374, %v390
        %v430 = vadd.f32 %v375, %v390
        %v431 = vadd.f32 %v376, %v390
        %v432 = vadd.f32 %v377, %v390
        %v433 = vadd.f32 %v378, %v390
        %v434 = vadd.f32 %v379, %v390
        %v435 = vadd.f32 %v380, %v390
        %v436 = vadd.f32 %v381, %v390
        %v437 = vadd.f32 %v382, %v390
        %v438 = vadd.f32 %v383, %v390
        %v439 = vadd.f32 %v384, %v390
        %v440 = vadd.f32 %v385, %v390
        %v441 = vadd.f32 %v386, %v390
        %v442 = vadd.f32 %v387, %v390
        %vm443 = vcmp.ge.f32.partialorder %v392, 0.0
        %vm444 = vcmp.ge.f32.partialorder %v393, 0.0
        %vm445 = vcmp.ge.f32.partialorder %v394, 0.0
        %vm446 = vcmp.ge.f32.partialorder %v395, 0.0
        %vm447 = vcmp.ge.f32.partialorder %v396, 0.0
        %vm448 = vcmp.ge.f32.partialorder %v397, 0.0
        %vm449 = vcmp.ge.f32.partialorder %v398, 0.0
        %vm450 = vcmp.ge.f32.partialorder %v399, 0.0
        %vm451 = vcmp.ge.f32.partialorder %v400, 0.0
        %vm452 = vcmp.ge.f32.partialorder %v401, 0.0
        %vm453 = vcmp.ge.f32.partialorder %v402, 0.0
        %vm454 = vcmp.ge.f32.partialorder %v403, 0.0
        %vm455 = vcmp.ge.f32.partialorder %v404, 0.0
        %vm456 = vcmp.ge.f32.partialorder %v405, 0.0
        %vm457 = vcmp.ge.f32.partialorder %v406, 0.0
        %vm458 = vcmp.ge.f32.partialorder %v407, 0.0
        %vm459 = vcmp.ge.f32.partialorder %v408, 0.0
        %vm460 = vcmp.ge.f32.partialorder %v409, 0.0
        %vm461 = vcmp.ge.f32.partialorder %v410, 0.0
        %vm462 = vcmp.ge.f32.partialorder %v411, 0.0
        %vm463 = vcmp.ge.f32.partialorder %v412, 0.0
        %vm464 = vcmp.ge.f32.partialorder %v413, 0.0
        %vm465 = vcmp.ge.f32.partialorder %v414, 0.0
        %vm466 = vcmp.ge.f32.partialorder %v415, 0.0
        %vm467 = vcmp.ge.f32.partialorder %v416, 0.0
        %vm468 = vcmp.ge.f32.partialorder %v417, 0.0
        %vm469 = vcmp.ge.f32.partialorder %v418, 0.0
        %vm470 = vcmp.ge.f32.partialorder %v419, 0.0
        %vm471 = vcmp.ge.f32.partialorder %v420, 0.0
        %vm472 = vcmp.ge.f32.partialorder %v421, 0.0
        %vm473 = vcmp.ge.f32.partialorder %v422, 0.0
        %vm474 = vcmp.ge.f32.partialorder %v423, 0.0
        %vm475 = vcmp.ge.f32.partialorder %v424, 0.0
        %vm476 = vcmp.ge.f32.partialorder %v425, 0.0
        %vm477 = vcmp.ge.f32.partialorder %v426, 0.0
        %vm478 = vcmp.ge.f32.partialorder %v427, 0.0
        %vm479 = vcmp.ge.f32.partialorder %v428, 0.0
        %vm480 = vcmp.ge.f32.partialorder %v429, 0.0
        %vm481 = vcmp.ge.f32.partialorder %v430, 0.0
        %vm482 = vcmp.ge.f32.partialorder %v431, 0.0
        %vm483 = vcmp.ge.f32.partialorder %v432, 0.0
        %vm484 = vcmp.ge.f32.partialorder %v433, 0.0
        %vm485 = vcmp.ge.f32.partialorder %v434, 0.0
        %vm486 = vcmp.ge.f32.partialorder %v435, 0.0
        %vm487 = vcmp.ge.f32.partialorder %v436, 0.0
        %vm488 = vcmp.ge.f32.partialorder %v437, 0.0
        %vm489 = vcmp.ge.f32.partialorder %v438, 0.0
        %vm490 = vcmp.ge.f32.partialorder %v439, 0.0
        %vm491 = vcmp.ge.f32.partialorder %v440, 0.0
        %vm492 = vcmp.ge.f32.partialorder %v441, 0.0
        %vm493 = vcmp.ge.f32.partialorder %v442, 0.0
        %v494 = vmul.f32 %v392, 0.01
        %v495 = vmul.f32 %v393, 0.01
        %v496 = vmul.f32 %v394, 0.01
        %v497 = vmul.f32 %v395, 0.01
        %v498 = vmul.f32 %v396, 0.01
        %v499 = vmul.f32 %v397, 0.01
        %v500 = vmul.f32 %v398, 0.01
        %v501 = vmul.f32 %v399, 0.01
        %v502 = vmul.f32 %v400, 0.01
        %v503 = vmul.f32 %v401, 0.01
        %v504 = vmul.f32 %v402, 0.01
        %v505 = vmul.f32 %v403, 0.01
        %v506 = vmul.f32 %v404, 0.01
        %v507 = vmul.f32 %v405, 0.01
        %v508 = vmul.f32 %v406, 0.01
        %v509 = vmul.f32 %v407, 0.01
        %v510 = vmul.f32 %v408, 0.01
        %v511 = vmul.f32 %v409, 0.01
        %v512 = vmul.f32 %v410, 0.01
        %v513 = vmul.f32 %v411, 0.01
        %v514 = vmul.f32 %v412, 0.01
        %v515 = vmul.f32 %v413, 0.01
        %v516 = vmul.f32 %v414, 0.01
        %v517 = vmul.f32 %v415, 0.01
        %v518 = vmul.f32 %v416, 0.01
        %v519 = vmul.f32 %v417, 0.01
        %v520 = vmul.f32 %v418, 0.01
        %v521 = vmul.f32 %v419, 0.01
        %v522 = vmul.f32 %v420, 0.01
        %v523 = vmul.f32 %v421, 0.01
        %v524 = vmul.f32 %v422, 0.01
        %v525 = vmul.f32 %v423, 0.01
        %v526 = vmul.f32 %v424, 0.01
        %v527 = vmul.f32 %v425, 0.01
        %v528 = vmul.f32 %v426, 0.01
        %v529 = vmul.f32 %v427, 0.01
        %v530 = vmul.f32 %v428, 0.01
        %v531 = vmul.f32 %v429, 0.01
        %v532 = vmul.f32 %v430, 0.01
        %v533 = vmul.f32 %v431, 0.01
        %v534 = vmul.f32 %v432, 0.01
        %v535 = vmul.f32 %v433, 0.01
        %v536 = vmul.f32 %v434, 0.01
        %v537 = vmul.f32 %v435, 0.01
        %v538 = vmul.f32 %v436, 0.01
        %v539 = vmul.f32 %v437, 0.01
        %v540 = vmul.f32 %v438, 0.01
        %v541 = vmul.f32 %v439, 0.01
        %v542 = vmul.f32 %v440, 0.01
        %v543 = vmul.f32 %v441, 0.01
        %v544 = vmul.f32 %v442, 0.01
        %v545 = vsel %vm443, %v392, %v494
        %v546 = vsel %vm444, %v393, %v495
        %v547 = vsel %vm445, %v394, %v496
        %v548 = vsel %vm446, %v395, %v497
        %v549 = vsel %vm447, %v396, %v498
        %v550 = vsel %vm448, %v397, %v499
        %v551 = vsel %vm449, %v398, %v500
        %v552 = vsel %vm450, %v399, %v501
        %v553 = vsel %vm451, %v400, %v502
        %v554 = vsel %vm452, %v401, %v503
        %v555 = vsel %vm453, %v402, %v504
        %v556 = vsel %vm454, %v403, %v505
        %v557 = vsel %vm455, %v404, %v506
        %v558 = vsel %vm456, %v405, %v507
        %v559 = vsel %vm457, %v406, %v508
        %v560 = vsel %vm458, %v407, %v509
        %v561 = vsel %vm459, %v408, %v510
        %v562 = vsel %vm460, %v409, %v511
        %v563 = vsel %vm461, %v410, %v512
        %v564 = vsel %vm462, %v411, %v513
        %v565 = vsel %vm463, %v412, %v514
        %v566 = vsel %vm464, %v413, %v515
        %v567 = vsel %vm465, %v414, %v516
        %v568 = vsel %vm466, %v415, %v517
        %v569 = vsel %vm467, %v416, %v518
        %v570 = vsel %vm468, %v417, %v519
        %v571 = vsel %vm469, %v418, %v520
        %v572 = vsel %vm470, %v419, %v521
        %v573 = vsel %vm471, %v420, %v522
        %v574 = vsel %vm472, %v421, %v523
        %v575 = vsel %vm473, %v422, %v524
        %v576 = vsel %vm474, %v423, %v525
        %v577 = vsel %vm475, %v424, %v526
        %v578 = vsel %vm476, %v425, %v527
        %v579 = vsel %vm477, %v426, %v528
        %v580 = vsel %vm478, %v427, %v529
        %v581 = vsel %vm479, %v428, %v530
        %v582 = vsel %vm480, %v429, %v531
        %v583 = vsel %vm481, %v430, %v532
        %v584 = vsel %vm482, %v431, %v533
        %v585 = vsel %vm483, %v432, %v534
        %v586 = vsel %vm484, %v433, %v535
        %v587 = vsel %vm485, %v434, %v536
        %v588 = vsel %vm486, %v435, %v537
        %v589 = vsel %vm487, %v436, %v538
        %v590 = vsel %vm488, %v437, %v539
        %v591 = vsel %vm489, %v438, %v540
        %v592 = vsel %vm490, %v439, %v541
        %v593 = vsel %vm491, %v440, %v542
        %v594 = vsel %vm492, %v441, %v543
        %v595 = vsel %vm493, %v442, %v544
        %v596 = vld [vmem:[%s1] sm:$0xff]
        %v597 = vld [vmem:[%s1 + $0x8] sm:$0x1]
        %v598 = vld [vmem:[%s1 + $0x10] sm:$0xff]
        %v599 = vld [vmem:[%s1 + $0x18] sm:$0x1]
        %v600 = vld [vmem:[%s1 + $0x20] sm:$0xff]
        %v601 = vld [vmem:[%s1 + $0x28] sm:$0x1]
        %v602 = vld [vmem:[%s1 + $0x30] sm:$0xff]
        %v603 = vld [vmem:[%s1 + $0x38] sm:$0x1]
        %v604 = vld [vmem:[%s1 + $0x40] sm:$0xff]
        %v605 = vld [vmem:[%s1 + $0x48] sm:$0x1]
        %v606 = vld [vmem:[%s1 + $0x50] sm:$0xff]
        %v607 = vld [vmem:[%s1 + $0x58] sm:$0x1]
        %v608 = vld [vmem:[%s1 + $0x60] sm:$0xff]
        %v609 = vld [vmem:[%s1 + $0x68] sm:$0x1]
        %v610 = vld [vmem:[%s1 + $0x70] sm:$0xff]
        %v611 = vld [vmem:[%s1 + $0x78] sm:$0x1]
        %v612 = vld [vmem:[%s1 + $0x80] sm:$0xff]
        %v613 = vld [vmem:[%s1 + $0x88] sm:$0x1]
        %v614 = vld [vmem:[%s1 + $0x90] sm:$0xff]
        %v615 = vld [vmem:[%s1 + $0xa0] sm:$0xff]
        %v616 = vld [vmem:[%s1 + $0xb0] sm:$0xff]
        %v617 = vld [vmem:[%s1 + $0xc0] sm:$0xff]
        %v618 = vld [vmem:[%s1 + $0xd0] sm:$0xff]
        %v619 = vld [vmem:[%s1 + $0xe0] sm:$0xff]
        %v620 = vld [vmem:[%s1 + $0xf0] sm:$0xff]
        %v621 = vld [vmem:[%s1 + $0x100] sm:$0xff]
        %v622 = vld [vmem:[%s1 + $0x110] sm:$0xff]
        %v623 = vld [vmem:[%s1 + $0x120] sm:$0xff]
        %v624 = vld [vmem:[%s1 + $0x128] sm:$0x1]
        %v625 = vld [vmem:[%s1 + $0x130] sm:$0xff]
        %v626 = vld [vmem:[%s1 + $0x138] sm:$0x1]
        %v627 = vld [vmem:[%s1 + $0x140] sm:$0xff]
        %v628 = vld [vmem:[%s1 + $0x148] sm:$0x1]
        %v629 = vld [vmem:[%s1 + $0x150] sm:$0xff]
        %v630 = vld [vmem:[%s1 + $0x158] sm:$0x1]
        %v631 = vld [vmem:[%s1 + $0x160] sm:$0xff]
        %v632 = vld [vmem:[%s1 + $0x168] sm:$0x1]
        %v633 = vld [vmem:[%s1 + $0x170] sm:$0xff]
        %v634 = vld [vmem:[%s1 + $0x178] sm:$0x1]
        %v635 = vld [vmem:[%s1 + $0x180] sm:$0xff]
        %v636 = vld [vmem:[%s1 + $0x188] sm:$0x1]
        %v637 = vld [vmem:[%s1 + $0x190] sm:$0xff]
        %v638 = vld [vmem:[%s1 + $0x198] sm:$0x1]
        %v639 = vld [vmem:[%s1 + $0x1b0] sm:$0xff]
        %v640 = vld [vmem:[%s1 + $0x1c0] sm:$0xff]
        %v641 = vld [vmem:[%s1 + $0x1d0] sm:$0xff]
        %v642 = vld [vmem:[%s1 + $0x1e0] sm:$0xff]
        %v643 = vld [vmem:[%s1 + $0x1f0] sm:$0xff]
        %v644 = vld [vmem:[%s1 + $0x200] sm:$0xff]
        %v645 = vld [vmem:[%s1 + $0x210] sm:$0xff]
        %v646 = vld [vmem:[%s1 + $0x220] sm:$0xff]
        %648 = vset.pattern.permute.xlu0 0
        %649 = vperm.xlu0 %648, %v596
        %v650 = vpop.permute.xlu0 %649
        %653 = vset.pattern.permute.xlu0 0
        %654 = vperm.xlu0 %653, %v597
        %v655 = vpop.permute.xlu0 %654
        %658 = vset.pattern.permute.xlu0 0
        %659 = vperm.xlu0 %658, %v598
        %v660 = vpop.permute.xlu0 %659
        %663 = vset.pattern.permute.xlu0 0
        %664 = vperm.xlu0 %663, %v599
        %v665 = vpop.permute.xlu0 %664
        %668 = vset.pattern.permute.xlu0 0
        %669 = vperm.xlu0 %668, %v600
        %v670 = vpop.permute.xlu0 %669
        %673 = vset.pattern.permute.xlu0 0
        %674 = vperm.xlu0 %673, %v601
        %v675 = vpop.permute.xlu0 %674
        %678 = vset.pattern.permute.xlu0 0
        %679 = vperm.xlu0 %678, %v602
        %v680 = vpop.permute.xlu0 %679
        %683 = vset.pattern.permute.xlu0 0
        %684 = vperm.xlu0 %683, %v603
        %v685 = vpop.permute.xlu0 %684
        %688 = vset.pattern.permute.xlu0 0
        %689 = vperm.xlu0 %688, %v604
        %v690 = vpop.permute.xlu0 %689
        %693 = vset.pattern.permute.xlu0 0
        %694 = vperm.xlu0 %693, %v605
        %v695 = vpop.permute.xlu0 %694
        %698 = vset.pattern.permute.xlu0 0
        %699 = vperm.xlu0 %698, %v606
        %v700 = vpop.permute.xlu0 %699
        %703 = vset.pattern.permute.xlu0 0
        %704 = vperm.xlu0 %703, %v607
        %v705 = vpop.permute.xlu0 %704
        %708 = vset.pattern.permute.xlu0 0
        %709 = vperm.xlu0 %708, %v608
        %v710 = vpop.permute.xlu0 %709
        %713 = vset.pattern.permute.xlu0 0
        %714 = vperm.xlu0 %713, %v609
        %v715 = vpop.permute.xlu0 %714
        %718 = vset.pattern.permute.xlu0 0
        %719 = vperm.xlu0 %718, %v610
        %v720 = vpop.permute.xlu0 %719
        %723 = vset.pattern.permute.xlu0 0
        %724 = vperm.xlu0 %723, %v611
        %v725 = vpop.permute.xlu0 %724
        %728 = vset.pattern.permute.xlu0 0
        %729 = vperm.xlu0 %728, %v612
        %v730 = vpop.permute.xlu0 %729
        %733 = vset.pattern.permute.xlu0 0
        %734 = vperm.xlu0 %733, %v613
        %v735 = vpop.permute.xlu0 %734
        %738 = vset.pattern.permute.xlu0 0
        %739 = vperm.xlu0 %738, %v614
        %v740 = vpop.permute.xlu0 %739
        %743 = vset.pattern.permute.xlu0 0
        %744 = vperm.xlu0 %743, %v615
        %v745 = vpop.permute.xlu0 %744
        %748 = vset.pattern.permute.xlu0 0
        %749 = vperm.xlu0 %748, %v616
        %v750 = vpop.permute.xlu0 %749
        %753 = vset.pattern.permute.xlu0 0
        %754 = vperm.xlu0 %753, %v617
        %v755 = vpop.permute.xlu0 %754
        %758 = vset.pattern.permute.xlu0 0
        %759 = vperm.xlu0 %758, %v618
        %v760 = vpop.permute.xlu0 %759
        %763 = vset.pattern.permute.xlu0 0
        %764 = vperm.xlu0 %763, %v619
        %v765 = vpop.permute.xlu0 %764
        %768 = vset.pattern.permute.xlu0 0
        %769 = vperm.xlu0 %768, %v620
        %v770 = vpop.permute.xlu0 %769
        %773 = vset.pattern.permute.xlu0 0
        %774 = vperm.xlu0 %773, %v621
        %v775 = vpop.permute.xlu0 %774
        %778 = vset.pattern.permute.xlu0 0
        %779 = vperm.xlu0 %778, %v622
        %v780 = vpop.permute.xlu0 %779
        %783 = vset.pattern.permute.xlu0 0
        %784 = vperm.xlu0 %783, %v623
        %v785 = vpop.permute.xlu0 %784
        %788 = vset.pattern.permute.xlu0 0
        %789 = vperm.xlu0 %788, %v624
        %v790 = vpop.permute.xlu0 %789
        %793 = vset.pattern.permute.xlu0 0
        %794 = vperm.xlu0 %793, %v625
        %v795 = vpop.permute.xlu0 %794
        %798 = vset.pattern.permute.xlu0 0
        %799 = vperm.xlu0 %798, %v626
        %v800 = vpop.permute.xlu0 %799
        %803 = vset.pattern.permute.xlu0 0
        %804 = vperm.xlu0 %803, %v627
        %v805 = vpop.permute.xlu0 %804
        %808 = vset.pattern.permute.xlu0 0
        %809 = vperm.xlu0 %808, %v628
        %v810 = vpop.permute.xlu0 %809
        %813 = vset.pattern.permute.xlu0 0
        %814 = vperm.xlu0 %813, %v629
        %v815 = vpop.permute.xlu0 %814
        %818 = vset.pattern.permute.xlu0 0
        %819 = vperm.xlu0 %818, %v630
        %v820 = vpop.permute.xlu0 %819
        %823 = vset.pattern.permute.xlu0 0
        %824 = vperm.xlu0 %823, %v631
        %v825 = vpop.permute.xlu0 %824
        %828 = vset.pattern.permute.xlu0 0
        %829 = vperm.xlu0 %828, %v632
        %v830 = vpop.permute.xlu0 %829
        %833 = vset.pattern.permute.xlu0 0
        %834 = vperm.xlu0 %833, %v633
        %v835 = vpop.permute.xlu0 %834
        %838 = vset.pattern.permute.xlu0 0
        %839 = vperm.xlu0 %838, %v634
        %v840 = vpop.permute.xlu0 %839
        %843 = vset.pattern.permute.xlu0 0
        %844 = vperm.xlu0 %843, %v635
        %v845 = vpop.permute.xlu0 %844
        %848 = vset.pattern.permute.xlu0 0
        %849 = vperm.xlu0 %848, %v636
        %v850 = vpop.permute.xlu0 %849
        %853 = vset.pattern.permute.xlu0 0
        %854 = vperm.xlu0 %853, %v637
        %v855 = vpop.permute.xlu0 %854
        %858 = vset.pattern.permute.xlu0 0
        %859 = vperm.xlu0 %858, %v638
        %v860 = vpop.permute.xlu0 %859
        %863 = vset.pattern.permute.xlu0 0
        %864 = vperm.xlu0 %863, %v639
        %v865 = vpop.permute.xlu0 %864
        %868 = vset.pattern.permute.xlu0 0
        %869 = vperm.xlu0 %868, %v640
        %v870 = vpop.permute.xlu0 %869
        %873 = vset.pattern.permute.xlu0 0
        %874 = vperm.xlu0 %873, %v641
        %v875 = vpop.permute.xlu0 %874
        %878 = vset.pattern.permute.xlu0 0
        %879 = vperm.xlu0 %878, %v642
        %v880 = vpop.permute.xlu0 %879
        %883 = vset.pattern.permute.xlu0 0
        %884 = vperm.xlu0 %883, %v643
        %v885 = vpop.permute.xlu0 %884
        %888 = vset.pattern.permute.xlu0 0
        %889 = vperm.xlu0 %888, %v644
        %v890 = vpop.permute.xlu0 %889
        %893 = vset.pattern.permute.xlu0 0
        %894 = vperm.xlu0 %893, %v645
        %v895 = vpop.permute.xlu0 %894
        %898 = vset.pattern.permute.xlu0 0
        %899 = vperm.xlu0 %898, %v646
        %v900 = vpop.permute.xlu0 %899
        %v902 = vmul.f32 %v545, %v650
        %v903 = vmul.f32 %v546, %v655
        %v904 = vmul.f32 %v547, %v660
        %v905 = vmul.f32 %v548, %v665
        %v906 = vmul.f32 %v549, %v670
        %v907 = vmul.f32 %v550, %v675
        %v908 = vmul.f32 %v551, %v680
        %v909 = vmul.f32 %v552, %v685
        %v910 = vmul.f32 %v553, %v690
        %v911 = vmul.f32 %v554, %v695
        %v912 = vmul.f32 %v555, %v700
        %v913 = vmul.f32 %v556, %v705
        %v914 = vmul.f32 %v557, %v710
        %v915 = vmul.f32 %v558, %v715
        %v916 = vmul.f32 %v559, %v720
        %v917 = vmul.f32 %v560, %v725
        %v918 = vmul.f32 %v561, %v730
        %v919 = vmul.f32 %v562, %v735
        %v920 = vmul.f32 %v563, %v740
        %v921 = vmul.f32 %v564, %v745
        %v922 = vmul.f32 %v565, %v750
        %v923 = vmul.f32 %v566, %v755
        %v924 = vmul.f32 %v567, %v760
        %v925 = vmul.f32 %v568, %v765
        %v926 = vmul.f32 %v569, %v770
        %v927 = vmul.f32 %v570, %v775
        %v928 = vmul.f32 %v571, %v780
        %v929 = vmul.f32 %v572, %v785
        %v930 = vmul.f32 %v573, %v790
        %v931 = vmul.f32 %v574, %v795
        %v932 = vmul.f32 %v575, %v800
        %v933 = vmul.f32 %v576, %v805
        %v934 = vmul.f32 %v577, %v810
        %v935 = vmul.f32 %v578, %v815
        %v936 = vmul.f32 %v579, %v820
        %v937 = vmul.f32 %v580, %v825
        %v938 = vmul.f32 %v581, %v830
        %v939 = vmul.f32 %v582, %v835
        %v940 = vmul.f32 %v583, %v840
        %v941 = vmul.f32 %v584, %v845
        %v942 = vmul.f32 %v585, %v850
        %v943 = vmul.f32 %v586, %v855
        %v944 = vmul.f32 %v587, %v860
        %v945 = vmul.f32 %v588, %v865
        %v946 = vmul.f32 %v589, %v870
        %v947 = vmul.f32 %v590, %v875
        %v948 = vmul.f32 %v591, %v880
        %v949 = vmul.f32 %v592, %v885
        %v950 = vmul.f32 %v593, %v890
        %v951 = vmul.f32 %v594, %v895
        %v952 = vmul.f32 %v595, %v900
        %v953 = vpack.c.bf16 %v904, %v902
        %v954 = vpack.c.bf16 %v908, %v906
        %v955 = vpack.c.bf16 %v912, %v910
        %v956 = vpack.c.bf16 %v916, %v914
        %v957 = vld [vmem:[%s4] sm:$0xf]
        %v958 = vld [vmem:[%s4 + $0x4] sm:$0xf]
        %v959 = vld [vmem:[%s4 + $0x8] sm:$0xf]
        %v960 = vld [vmem:[%s4 + $0xc] sm:$0xf]
        %v961 = vld [vmem:[%s4 + $0x10] sm:$0xf]
        %v962 = vld [vmem:[%s4 + $0x14] sm:$0xf]
        %v963 = vld [vmem:[%s4 + $0x18] sm:$0xf]
        %v964 = vld [vmem:[%s4 + $0x1c] sm:$0xf]
        %v965 = vld [vmem:[%s4 + $0x20] sm:$0xf]
        %v966 = vld [vmem:[%s4 + $0x24] sm:$0xf]
        %v967 = vld [vmem:[%s4 + $0x28] sm:$0xf]
        %v968 = vld [vmem:[%s4 + $0x2c] sm:$0xf]
        %v969 = vld [vmem:[%s4 + $0x30] sm:$0xf]
        %v970 = vld [vmem:[%s4 + $0x34] sm:$0xf]
        %v971 = vld [vmem:[%s4 + $0x38] sm:$0xf]
        %v972 = vld [vmem:[%s4 + $0x3c] sm:$0xf]
        %v973 = vpack.c.bf16 %v921, %v920
        %v974 = vpack.c.bf16 %v923, %v922
        %v975 = vpack.c.bf16 %v925, %v924
        %v976 = vpack.c.bf16 %v927, %v926
        %s977 = scalar_lea.vmem %s4, 64
        %v978 = vld [vmem:[%s977] sm:$0xf]
        %v979 = vld [vmem:[%s977 + $0x4] sm:$0xf]
        %v980 = vld [vmem:[%s977 + $0x8] sm:$0xf]
        %v981 = vld [vmem:[%s977 + $0xc] sm:$0xf]
        %v982 = vld [vmem:[%s977 + $0x10] sm:$0xf]
        %v983 = vld [vmem:[%s977 + $0x14] sm:$0xf]
        %v984 = vld [vmem:[%s977 + $0x18] sm:$0xf]
        %v985 = vld [vmem:[%s977 + $0x1c] sm:$0xf]
        %v986 = vld [vmem:[%s977 + $0x20] sm:$0xf]
        %v987 = vld [vmem:[%s977 + $0x24] sm:$0xf]
        %v988 = vld [vmem:[%s977 + $0x28] sm:$0xf]
        %v989 = vld [vmem:[%s977 + $0x2c] sm:$0xf]
        %v990 = vld [vmem:[%s977 + $0x30] sm:$0xf]
        %v991 = vld [vmem:[%s977 + $0x34] sm:$0xf]
        %v992 = vld [vmem:[%s977 + $0x38] sm:$0xf]
        %v993 = vld [vmem:[%s977 + $0x3c] sm:$0xf]
        %v1010 = vunpack.c.l.b16 %v978
        %v1011 = vunpack.c.l.b16 %v979
        %v1012 = vunpack.c.l.b16 %v980
        %v1013 = vunpack.c.l.b16 %v981
        %v1014 = vunpack.c.l.b16 %v982
        %v1015 = vunpack.c.l.b16 %v983
        %v1016 = vunpack.c.l.b16 %v984
        %v1017 = vunpack.c.l.b16 %v985
        %v1018 = vunpack.c.l.b16 %v986
        %v1019 = vunpack.c.l.b16 %v987
        %v1020 = vunpack.c.l.b16 %v988
        %v1021 = vunpack.c.l.b16 %v989
        %v1022 = vunpack.c.l.b16 %v990
        %v1023 = vunpack.c.l.b16 %v991
        %v1024 = vunpack.c.l.b16 %v992
        %v1025 = vunpack.c.l.b16 %v993
        %v1026 = vpack.c.b16 %v1011, %v1010
        %v1027 = vpack.c.b16 %v1013, %v1012
        %v1028 = vpack.c.b16 %v1015, %v1014
        %v1029 = vpack.c.b16 %v1017, %v1016
        %v1030 = vpack.c.b16 %v1019, %v1018
        %v1031 = vpack.c.b16 %v1021, %v1020
        %v1032 = vpack.c.b16 %v1023, %v1022
        %v1033 = vpack.c.b16 %v1025, %v1024
        %1042 = vmatpush.bf16.msra.mxu0 %v1033
        %1043 = vmatpush.bf16.msra.mxu0 %v1032
        %1044 = vmatpush.bf16.msra.mxu0 %v1031
        %1045 = vmatpush.bf16.msra.mxu0 %v1030
        %1046 = vmatpush.bf16.msra.mxu0 %v1029
        %1047 = vmatpush.bf16.msra.mxu0 %v1028
        %1048 = vmatpush.bf16.msra.mxu0 %v1027
        %1049 = vmatpush.bf16.msra.mxu0 %v1026
        %1050 = vmatmul.bf16.gmra.mxu0 %v973
        %v1051 = vpop.f32.mrf.mxu0
        %v1052 = vadd.f32 0.0, %v1051
        %v1053 = vpop.f32.mrf.mxu0
        %v1054 = vadd.f32 0.0, %v1053
        %1055 = vmatmul.bf16.gmra.mxu0 %v974
        %v1056 = vpop.f32.mrf.mxu0
        %v1057 = vadd.f32 0.0, %v1056
        %v1058 = vpop.f32.mrf.mxu0
        %v1059 = vadd.f32 0.0, %v1058
        %1060 = vmatmul.bf16.gmra.mxu0 %v975
        %v1061 = vpop.f32.mrf.mxu0
        %v1062 = vadd.f32 0.0, %v1061
        %v1063 = vpop.f32.mrf.mxu0
        %v1064 = vadd.f32 0.0, %v1063
        %1065 = vmatmul.bf16.gmra.mxu0 %v976
        %v1066 = vpop.f32.mrf.mxu0
        %v1067 = vadd.f32 0.0, %v1066
        %v1068 = vpop.f32.mrf.mxu0
        %v1069 = vadd.f32 0.0, %v1068
        %1070 = vdwg.mxu0
        %v1087 = vunpack.c.l.b16 %v957
        %v1088 = vunpack.c.l.b16 %v958
        %v1089 = vunpack.c.l.b16 %v959
        %v1090 = vunpack.c.l.b16 %v960
        %v1091 = vunpack.c.l.b16 %v961
        %v1092 = vunpack.c.l.b16 %v962
        %v1093 = vunpack.c.l.b16 %v963
        %v1094 = vunpack.c.l.b16 %v964
        %v1095 = vunpack.c.l.b16 %v965
        %v1096 = vunpack.c.l.b16 %v966
        %v1097 = vunpack.c.l.b16 %v967
        %v1098 = vunpack.c.l.b16 %v968
        %v1099 = vunpack.c.l.b16 %v969
        %v1100 = vunpack.c.l.b16 %v970
        %v1101 = vunpack.c.l.b16 %v971
        %v1102 = vunpack.c.l.b16 %v972
        %v1103 = vpack.c.b16 %v1088, %v1087
        %v1104 = vpack.c.b16 %v1090, %v1089
        %v1105 = vpack.c.b16 %v1092, %v1091
        %v1106 = vpack.c.b16 %v1094, %v1093
        %v1107 = vpack.c.b16 %v1096, %v1095
        %v1108 = vpack.c.b16 %v1098, %v1097
        %v1109 = vpack.c.b16 %v1100, %v1099
        %v1110 = vpack.c.b16 %v1102, %v1101
        %1119 = vmatpush.bf16.msra.mxu0 %v1110
        %1120 = vmatpush.bf16.msra.mxu0 %v1109
        %1121 = vmatpush.bf16.msra.mxu0 %v1108
        %1122 = vmatpush.bf16.msra.mxu0 %v1107
        %1123 = vmatpush.bf16.msra.mxu0 %v1106
        %1124 = vmatpush.bf16.msra.mxu0 %v1105
        %1125 = vmatpush.bf16.msra.mxu0 %v1104
        %1126 = vmatpush.bf16.msra.mxu0 %v1103
        %1127 = vmatmul.bf16.gmra.mxu0 %v953
        %v1128 = vpop.f32.mrf.mxu0
        %v1129 = vadd.f32 %v1052, %v1128
        %v1130 = vpop.f32.mrf.mxu0
        %v1131 = vadd.f32 %v1054, %v1130
        %1132 = vmatmul.bf16.gmra.mxu0 %v954
        %v1133 = vpop.f32.mrf.mxu0
        %v1134 = vadd.f32 %v1057, %v1133
        %v1135 = vpop.f32.mrf.mxu0
        %v1136 = vadd.f32 %v1059, %v1135
        %1137 = vmatmul.bf16.gmra.mxu0 %v955
        %v1138 = vpop.f32.mrf.mxu0
        %v1139 = vadd.f32 %v1062, %v1138
        %v1140 = vpop.f32.mrf.mxu0
        %v1141 = vadd.f32 %v1064, %v1140
        %1142 = vmatmul.bf16.gmra.mxu0 %v956
        %v1143 = vpop.f32.mrf.mxu0
        %v1144 = vadd.f32 %v1067, %v1143
        %v1145 = vpop.f32.mrf.mxu0
        %v1146 = vadd.f32 %v1069, %v1145
        %1147 = vdwg.mxu0
        %vm1164 = vcmask 1046528
        %v1165 = vrot.slane %v902, 1
        %v1166 = vrot.slane %v903, 1
        %v1167 = vsel %vm1164, %v1165, %v1166
        %v1168 = vrot.slane %v904, 1
        %v1169 = vrot.slane %v905, 1
        %v1170 = vsel %vm1164, %v1168, %v1169
        %v1171 = vrot.slane %v906, 1
        %v1172 = vrot.slane %v907, 1
        %v1173 = vsel %vm1164, %v1171, %v1172
        %v1174 = vrot.slane %v908, 1
        %v1175 = vrot.slane %v909, 1
        %v1176 = vsel %vm1164, %v1174, %v1175
        %v1177 = vrot.slane %v910, 1
        %v1178 = vrot.slane %v911, 1
        %v1179 = vsel %vm1164, %v1177, %v1178
        %v1180 = vrot.slane %v912, 1
        %v1181 = vrot.slane %v913, 1
        %v1182 = vsel %vm1164, %v1180, %v1181
        %v1183 = vrot.slane %v914, 1
        %v1184 = vrot.slane %v915, 1
        %v1185 = vsel %vm1164, %v1183, %v1184
        %v1186 = vrot.slane %v916, 1
        %v1187 = vrot.slane %v917, 1
        %v1188 = vsel %vm1164, %v1186, %v1187
        %v1197 = vpack.c.bf16 %v1170, %v1167
        %v1198 = vpack.c.bf16 %v1176, %v1173
        %v1199 = vpack.c.bf16 %v1182, %v1179
        %v1200 = vpack.c.bf16 %v1188, %v1185
        %s1201 = scalar_lea.vmem %s4, 128
        %v1202 = vld [vmem:[%s1201] sm:$0xf]
        %v1203 = vld [vmem:[%s1201 + $0x4] sm:$0xf]
        %v1204 = vld [vmem:[%s1201 + $0x8] sm:$0xf]
        %v1205 = vld [vmem:[%s1201 + $0xc] sm:$0xf]
        %v1206 = vld [vmem:[%s1201 + $0x10] sm:$0xf]
        %v1207 = vld [vmem:[%s1201 + $0x14] sm:$0xf]
        %v1208 = vld [vmem:[%s1201 + $0x18] sm:$0xf]
        %v1209 = vld [vmem:[%s1201 + $0x1c] sm:$0xf]
        %v1210 = vld [vmem:[%s1201 + $0x20] sm:$0xf]
        %v1211 = vld [vmem:[%s1201 + $0x24] sm:$0xf]
        %v1212 = vld [vmem:[%s1201 + $0x28] sm:$0xf]
        %v1213 = vld [vmem:[%s1201 + $0x2c] sm:$0xf]
        %v1214 = vld [vmem:[%s1201 + $0x30] sm:$0xf]
        %v1215 = vld [vmem:[%s1201 + $0x34] sm:$0xf]
        %v1216 = vld [vmem:[%s1201 + $0x38] sm:$0xf]
        %v1217 = vld [vmem:[%s1201 + $0x3c] sm:$0xf]
        %v1234 = vunpack.c.l.b16 %v1202
        %v1235 = vunpack.c.l.b16 %v1203
        %v1236 = vunpack.c.l.b16 %v1204
        %v1237 = vunpack.c.l.b16 %v1205
        %v1238 = vunpack.c.l.b16 %v1206
        %v1239 = vunpack.c.l.b16 %v1207
        %v1240 = vunpack.c.l.b16 %v1208
        %v1241 = vunpack.c.l.b16 %v1209
        %v1242 = vunpack.c.l.b16 %v1210
        %v1243 = vunpack.c.l.b16 %v1211
        %v1244 = vunpack.c.l.b16 %v1212
        %v1245 = vunpack.c.l.b16 %v1213
        %v1246 = vunpack.c.l.b16 %v1214
        %v1247 = vunpack.c.l.b16 %v1215
        %v1248 = vunpack.c.l.b16 %v1216
        %v1249 = vunpack.c.l.b16 %v1217
        %v1250 = vpack.c.b16 %v1235, %v1234
        %v1251 = vpack.c.b16 %v1237, %v1236
        %v1252 = vpack.c.b16 %v1239, %v1238
        %v1253 = vpack.c.b16 %v1241, %v1240
        %v1254 = vpack.c.b16 %v1243, %v1242
        %v1255 = vpack.c.b16 %v1245, %v1244
        %v1256 = vpack.c.b16 %v1247, %v1246
        %v1257 = vpack.c.b16 %v1249, %v1248
        %1266 = vmatpush.bf16.msra.mxu0 %v1257
        %1267 = vmatpush.bf16.msra.mxu0 %v1256
        %1268 = vmatpush.bf16.msra.mxu0 %v1255
        %1269 = vmatpush.bf16.msra.mxu0 %v1254
        %1270 = vmatpush.bf16.msra.mxu0 %v1253
        %1271 = vmatpush.bf16.msra.mxu0 %v1252
        %1272 = vmatpush.bf16.msra.mxu0 %v1251
        %1273 = vmatpush.bf16.msra.mxu0 %v1250
        %1274 = vmatmul.bf16.gmra.mxu0 %v1197
        %v1275 = vpop.f32.mrf.mxu0
        %v1276 = vadd.f32 0.0, %v1275
        %v1277 = vpop.f32.mrf.mxu0
        %v1278 = vadd.f32 0.0, %v1277
        %1279 = vmatmul.bf16.gmra.mxu0 %v1198
        %v1280 = vpop.f32.mrf.mxu0
        %v1281 = vadd.f32 0.0, %v1280
        %v1282 = vpop.f32.mrf.mxu0
        %v1283 = vadd.f32 0.0, %v1282
        %1284 = vmatmul.bf16.gmra.mxu0 %v1199
        %v1285 = vpop.f32.mrf.mxu0
        %v1286 = vadd.f32 0.0, %v1285
        %v1287 = vpop.f32.mrf.mxu0
        %v1288 = vadd.f32 0.0, %v1287
        %1289 = vmatmul.bf16.gmra.mxu0 %v1200
        %v1290 = vpop.f32.mrf.mxu0
        %v1291 = vadd.f32 0.0, %v1290
        %v1292 = vpop.f32.mrf.mxu0
        %v1293 = vadd.f32 0.0, %v1292
        %1294 = vdwg.mxu0
        %v1295 = vadd.f32 %v1129, %v1276
        %v1296 = vadd.f32 %v1131, %v1278
        %v1297 = vadd.f32 %v1134, %v1281
        %v1298 = vadd.f32 %v1136, %v1283
        %v1299 = vadd.f32 %v1139, %v1286
        %v1300 = vadd.f32 %v1141, %v1288
        %v1301 = vadd.f32 %v1144, %v1291
        %v1302 = vadd.f32 %v1146, %v1293
        %v1303 = vpack.c.bf16 %v931, %v929
        %v1304 = vpack.c.bf16 %v935, %v933
        %v1305 = vpack.c.bf16 %v939, %v937
        %v1306 = vpack.c.bf16 %v943, %v941
        %s1307 = scalar_lea.vmem %s4, 192
        %v1308 = vld [vmem:[%s1307] sm:$0xf]
        %v1309 = vld [vmem:[%s1307 + $0x4] sm:$0xf]
        %v1310 = vld [vmem:[%s1307 + $0x8] sm:$0xf]
        %v1311 = vld [vmem:[%s1307 + $0xc] sm:$0xf]
        %v1312 = vld [vmem:[%s1307 + $0x10] sm:$0xf]
        %v1313 = vld [vmem:[%s1307 + $0x14] sm:$0xf]
        %v1314 = vld [vmem:[%s1307 + $0x18] sm:$0xf]
        %v1315 = vld [vmem:[%s1307 + $0x1c] sm:$0xf]
        %v1316 = vld [vmem:[%s1307 + $0x20] sm:$0xf]
        %v1317 = vld [vmem:[%s1307 + $0x24] sm:$0xf]
        %v1318 = vld [vmem:[%s1307 + $0x28] sm:$0xf]
        %v1319 = vld [vmem:[%s1307 + $0x2c] sm:$0xf]
        %v1320 = vld [vmem:[%s1307 + $0x30] sm:$0xf]
        %v1321 = vld [vmem:[%s1307 + $0x34] sm:$0xf]
        %v1322 = vld [vmem:[%s1307 + $0x38] sm:$0xf]
        %v1323 = vld [vmem:[%s1307 + $0x3c] sm:$0xf]
        %v1340 = vunpack.c.l.b16 %v1308
        %v1341 = vunpack.c.l.b16 %v1309
        %v1342 = vunpack.c.l.b16 %v1310
        %v1343 = vunpack.c.l.b16 %v1311
        %v1344 = vunpack.c.l.b16 %v1312
        %v1345 = vunpack.c.l.b16 %v1313
        %v1346 = vunpack.c.l.b16 %v1314
        %v1347 = vunpack.c.l.b16 %v1315
        %v1348 = vunpack.c.l.b16 %v1316
        %v1349 = vunpack.c.l.b16 %v1317
        %v1350 = vunpack.c.l.b16 %v1318
        %v1351 = vunpack.c.l.b16 %v1319
        %v1352 = vunpack.c.l.b16 %v1320
        %v1353 = vunpack.c.l.b16 %v1321
        %v1354 = vunpack.c.l.b16 %v1322
        %v1355 = vunpack.c.l.b16 %v1323
        %v1356 = vpack.c.b16 %v1341, %v1340
        %v1357 = vpack.c.b16 %v1343, %v1342
        %v1358 = vpack.c.b16 %v1345, %v1344
        %v1359 = vpack.c.b16 %v1347, %v1346
        %v1360 = vpack.c.b16 %v1349, %v1348
        %v1361 = vpack.c.b16 %v1351, %v1350
        %v1362 = vpack.c.b16 %v1353, %v1352
        %v1363 = vpack.c.b16 %v1355, %v1354
        %1372 = vmatpush.bf16.msra.mxu0 %v1363
        %1373 = vmatpush.bf16.msra.mxu0 %v1362
        %1374 = vmatpush.bf16.msra.mxu0 %v1361
        %1375 = vmatpush.bf16.msra.mxu0 %v1360
        %1376 = vmatpush.bf16.msra.mxu0 %v1359
        %1377 = vmatpush.bf16.msra.mxu0 %v1358
        %1378 = vmatpush.bf16.msra.mxu0 %v1357
        %1379 = vmatpush.bf16.msra.mxu0 %v1356
        %1380 = vmatmul.bf16.gmra.mxu0 %v1303
        %v1381 = vpop.f32.mrf.mxu0
        %v1382 = vadd.f32 0.0, %v1381
        %v1383 = vpop.f32.mrf.mxu0
        %v1384 = vadd.f32 0.0, %v1383
        %1385 = vmatmul.bf16.gmra.mxu0 %v1304
        %v1386 = vpop.f32.mrf.mxu0
        %v1387 = vadd.f32 0.0, %v1386
        %v1388 = vpop.f32.mrf.mxu0
        %v1389 = vadd.f32 0.0, %v1388
        %1390 = vmatmul.bf16.gmra.mxu0 %v1305
        %v1391 = vpop.f32.mrf.mxu0
        %v1392 = vadd.f32 0.0, %v1391
        %v1393 = vpop.f32.mrf.mxu0
        %v1394 = vadd.f32 0.0, %v1393
        %1395 = vmatmul.bf16.gmra.mxu0 %v1306
        %v1396 = vpop.f32.mrf.mxu0
        %v1397 = vadd.f32 0.0, %v1396
        %v1398 = vpop.f32.mrf.mxu0
        %v1399 = vadd.f32 0.0, %v1398
        %1400 = vdwg.mxu0
        %v1401 = vadd.f32 %v1295, %v1382
        %v1402 = vadd.f32 %v1296, %v1384
        %v1403 = vadd.f32 %v1297, %v1387
        %v1404 = vadd.f32 %v1298, %v1389
        %v1405 = vadd.f32 %v1299, %v1392
        %v1406 = vadd.f32 %v1300, %v1394
        %v1407 = vadd.f32 %v1301, %v1397
        %v1408 = vadd.f32 %v1302, %v1399
        %v1409 = vpack.c.bf16 %v946, %v945
        %v1410 = vpack.c.bf16 %v948, %v947
        %v1411 = vpack.c.bf16 %v950, %v949
        %v1412 = vpack.c.bf16 %v952, %v951
        %s1413 = scalar_lea.vmem %s4, 256
        %v1414 = vld [vmem:[%s1413] sm:$0xf]
        %v1415 = vld [vmem:[%s1413 + $0x4] sm:$0xf]
        %v1416 = vld [vmem:[%s1413 + $0x8] sm:$0xf]
        %v1417 = vld [vmem:[%s1413 + $0xc] sm:$0xf]
        %v1418 = vld [vmem:[%s1413 + $0x10] sm:$0xf]
        %v1419 = vld [vmem:[%s1413 + $0x14] sm:$0xf]
        %v1420 = vld [vmem:[%s1413 + $0x18] sm:$0xf]
        %v1421 = vld [vmem:[%s1413 + $0x1c] sm:$0xf]
        %v1422 = vld [vmem:[%s1413 + $0x20] sm:$0xf]
        %v1423 = vld [vmem:[%s1413 + $0x24] sm:$0xf]
        %v1424 = vld [vmem:[%s1413 + $0x28] sm:$0xf]
        %v1425 = vld [vmem:[%s1413 + $0x2c] sm:$0xf]
        %v1426 = vld [vmem:[%s1413 + $0x30] sm:$0xf]
        %v1427 = vld [vmem:[%s1413 + $0x34] sm:$0xf]
        %v1428 = vld [vmem:[%s1413 + $0x38] sm:$0xf]
        %v1429 = vld [vmem:[%s1413 + $0x3c] sm:$0xf]
        %v1446 = vunpack.c.l.b16 %v1414
        %v1447 = vunpack.c.l.b16 %v1415
        %v1448 = vunpack.c.l.b16 %v1416
        %v1449 = vunpack.c.l.b16 %v1417
        %v1450 = vunpack.c.l.b16 %v1418
        %v1451 = vunpack.c.l.b16 %v1419
        %v1452 = vunpack.c.l.b16 %v1420
        %v1453 = vunpack.c.l.b16 %v1421
        %v1454 = vunpack.c.l.b16 %v1422
        %v1455 = vunpack.c.l.b16 %v1423
        %v1456 = vunpack.c.l.b16 %v1424
        %v1457 = vunpack.c.l.b16 %v1425
        %v1458 = vunpack.c.l.b16 %v1426
        %v1459 = vunpack.c.l.b16 %v1427
        %v1460 = vunpack.c.l.b16 %v1428
        %v1461 = vunpack.c.l.b16 %v1429
        %v1462 = vpack.c.b16 %v1447, %v1446
        %v1463 = vpack.c.b16 %v1449, %v1448
        %v1464 = vpack.c.b16 %v1451, %v1450
        %v1465 = vpack.c.b16 %v1453, %v1452
        %v1466 = vpack.c.b16 %v1455, %v1454
        %v1467 = vpack.c.b16 %v1457, %v1456
        %v1468 = vpack.c.b16 %v1459, %v1458
        %v1469 = vpack.c.b16 %v1461, %v1460
        %1478 = vmatpush.bf16.msra.mxu0 %v1469
        %1479 = vmatpush.bf16.msra.mxu0 %v1468
        %1480 = vmatpush.bf16.msra.mxu0 %v1467
        %1481 = vmatpush.bf16.msra.mxu0 %v1466
        %1482 = vmatpush.bf16.msra.mxu0 %v1465
        %1483 = vmatpush.bf16.msra.mxu0 %v1464
        %1484 = vmatpush.bf16.msra.mxu0 %v1463
        %1485 = vmatpush.bf16.msra.mxu0 %v1462
        %1486 = vmatmul.bf16.gmra.mxu0 %v1409
        %v1487 = vpop.f32.mrf.mxu0
        %v1488 = vadd.f32 0.0, %v1487
        %v1489 = vpop.f32.mrf.mxu0
        %v1490 = vadd.f32 0.0, %v1489
        %1491 = vmatmul.bf16.gmra.mxu0 %v1410
        %v1492 = vpop.f32.mrf.mxu0
        %v1493 = vadd.f32 0.0, %v1492
        %v1494 = vpop.f32.mrf.mxu0
        %v1495 = vadd.f32 0.0, %v1494
        %1496 = vmatmul.bf16.gmra.mxu0 %v1411
        %v1497 = vpop.f32.mrf.mxu0
        %v1498 = vadd.f32 0.0, %v1497
        %v1499 = vpop.f32.mrf.mxu0
        %v1500 = vadd.f32 0.0, %v1499
        %1501 = vmatmul.bf16.gmra.mxu0 %v1412
        %v1502 = vpop.f32.mrf.mxu0
        %v1503 = vadd.f32 0.0, %v1502
        %v1504 = vpop.f32.mrf.mxu0
        %v1505 = vadd.f32 0.0, %v1504
        %1506 = vdwg.mxu0
        %v1507 = vadd.f32 %v1401, %v1488
        %v1508 = vadd.f32 %v1402, %v1490
        %v1509 = vadd.f32 %v1403, %v1493
        %v1510 = vadd.f32 %v1404, %v1495
        %v1511 = vadd.f32 %v1405, %v1498
        %v1512 = vadd.f32 %v1406, %v1500
        %v1513 = vadd.f32 %v1407, %v1503
        %v1514 = vadd.f32 %v1408, %v1505
        %v1531 = vrot.slane %v929, 1
        %v1532 = vrot.slane %v930, 1
        %v1533 = vsel %vm1164, %v1531, %v1532
        %v1534 = vrot.slane %v931, 1
        %v1535 = vrot.slane %v932, 1
        %v1536 = vsel %vm1164, %v1534, %v1535
        %v1537 = vrot.slane %v933, 1
        %v1538 = vrot.slane %v934, 1
        %v1539 = vsel %vm1164, %v1537, %v1538
        %v1540 = vrot.slane %v935, 1
        %v1541 = vrot.slane %v936, 1
        %v1542 = vsel %vm1164, %v1540, %v1541
        %v1543 = vrot.slane %v937, 1
        %v1544 = vrot.slane %v938, 1
        %v1545 = vsel %vm1164, %v1543, %v1544
        %v1546 = vrot.slane %v939, 1
        %v1547 = vrot.slane %v940, 1
        %v1548 = vsel %vm1164, %v1546, %v1547
        %v1549 = vrot.slane %v941, 1
        %v1550 = vrot.slane %v942, 1
        %v1551 = vsel %vm1164, %v1549, %v1550
        %v1552 = vrot.slane %v943, 1
        %v1553 = vrot.slane %v944, 1
        %v1554 = vsel %vm1164, %v1552, %v1553
        %v1563 = vpack.c.bf16 %v1536, %v1533
        %v1564 = vpack.c.bf16 %v1542, %v1539
        %v1565 = vpack.c.bf16 %v1548, %v1545
        %v1566 = vpack.c.bf16 %v1554, %v1551
        %s1567 = scalar_lea.vmem %s4, 320
        %v1568 = vld [vmem:[%s1567] sm:$0xf]
        %v1569 = vld [vmem:[%s1567 + $0x4] sm:$0xf]
        %v1570 = vld [vmem:[%s1567 + $0x8] sm:$0xf]
        %v1571 = vld [vmem:[%s1567 + $0xc] sm:$0xf]
        %v1572 = vld [vmem:[%s1567 + $0x10] sm:$0xf]
        %v1573 = vld [vmem:[%s1567 + $0x14] sm:$0xf]
        %v1574 = vld [vmem:[%s1567 + $0x18] sm:$0xf]
        %v1575 = vld [vmem:[%s1567 + $0x1c] sm:$0xf]
        %v1576 = vld [vmem:[%s1567 + $0x20] sm:$0xf]
        %v1577 = vld [vmem:[%s1567 + $0x24] sm:$0xf]
        %v1578 = vld [vmem:[%s1567 + $0x28] sm:$0xf]
        %v1579 = vld [vmem:[%s1567 + $0x2c] sm:$0xf]
        %v1580 = vld [vmem:[%s1567 + $0x30] sm:$0xf]
        %v1581 = vld [vmem:[%s1567 + $0x34] sm:$0xf]
        %v1582 = vld [vmem:[%s1567 + $0x38] sm:$0xf]
        %v1583 = vld [vmem:[%s1567 + $0x3c] sm:$0xf]
        %v1600 = vunpack.c.l.b16 %v1568
        %v1601 = vunpack.c.l.b16 %v1569
        %v1602 = vunpack.c.l.b16 %v1570
        %v1603 = vunpack.c.l.b16 %v1571
        %v1604 = vunpack.c.l.b16 %v1572
        %v1605 = vunpack.c.l.b16 %v1573
        %v1606 = vunpack.c.l.b16 %v1574
        %v1607 = vunpack.c.l.b16 %v1575
        %v1608 = vunpack.c.l.b16 %v1576
        %v1609 = vunpack.c.l.b16 %v1577
        %v1610 = vunpack.c.l.b16 %v1578
        %v1611 = vunpack.c.l.b16 %v1579
        %v1612 = vunpack.c.l.b16 %v1580
        %v1613 = vunpack.c.l.b16 %v1581
        %v1614 = vunpack.c.l.b16 %v1582
        %v1615 = vunpack.c.l.b16 %v1583
        %v1616 = vpack.c.b16 %v1601, %v1600
        %v1617 = vpack.c.b16 %v1603, %v1602
        %v1618 = vpack.c.b16 %v1605, %v1604
        %v1619 = vpack.c.b16 %v1607, %v1606
        %v1620 = vpack.c.b16 %v1609, %v1608
        %v1621 = vpack.c.b16 %v1611, %v1610
        %v1622 = vpack.c.b16 %v1613, %v1612
        %v1623 = vpack.c.b16 %v1615, %v1614
        %1632 = vmatpush.bf16.msra.mxu0 %v1623
        %1633 = vmatpush.bf16.msra.mxu0 %v1622
        %1634 = vmatpush.bf16.msra.mxu0 %v1621
        %1635 = vmatpush.bf16.msra.mxu0 %v1620
        %1636 = vmatpush.bf16.msra.mxu0 %v1619
        %1637 = vmatpush.bf16.msra.mxu0 %v1618
        %1638 = vmatpush.bf16.msra.mxu0 %v1617
        %1639 = vmatpush.bf16.msra.mxu0 %v1616
        %1640 = vmatmul.bf16.gmra.mxu0 %v1563
        %v1641 = vpop.f32.mrf.mxu0
        %v1642 = vadd.f32 0.0, %v1641
        %v1643 = vpop.f32.mrf.mxu0
        %v1644 = vadd.f32 0.0, %v1643
        %1645 = vmatmul.bf16.gmra.mxu0 %v1564
        %v1646 = vpop.f32.mrf.mxu0
        %v1647 = vadd.f32 0.0, %v1646
        %v1648 = vpop.f32.mrf.mxu0
        %v1649 = vadd.f32 0.0, %v1648
        %1650 = vmatmul.bf16.gmra.mxu0 %v1565
        %v1651 = vpop.f32.mrf.mxu0
        %v1652 = vadd.f32 0.0, %v1651
        %v1653 = vpop.f32.mrf.mxu0
        %v1654 = vadd.f32 0.0, %v1653
        %1655 = vmatmul.bf16.gmra.mxu0 %v1566
        %v1656 = vpop.f32.mrf.mxu0
        %v1657 = vadd.f32 0.0, %v1656
        %v1658 = vpop.f32.mrf.mxu0
        %v1659 = vadd.f32 0.0, %v1658
        %1660 = vdwg.mxu0
        %v1661 = vadd.f32 %v1507, %v1642
        %v1662 = vadd.f32 %v1508, %v1644
        %v1663 = vadd.f32 %v1509, %v1647
        %v1664 = vadd.f32 %v1510, %v1649
        %v1665 = vadd.f32 %v1511, %v1652
        %v1666 = vadd.f32 %v1512, %v1654
        %v1667 = vadd.f32 %v1513, %v1657
        %v1668 = vadd.f32 %v1514, %v1659
        %v1669 = vpack.c.bf16 %v906, %v904
        %v1670 = vpack.c.bf16 %v910, %v908
        %v1671 = vpack.c.bf16 %v914, %v912
        %v1672 = vpack.c.bf16 %v918, %v916
        %s1673 = scalar_lea.vmem %s4, 384
        %v1674 = vld [vmem:[%s1673] sm:$0xf]
        %v1675 = vld [vmem:[%s1673 + $0x4] sm:$0xf]
        %v1676 = vld [vmem:[%s1673 + $0x8] sm:$0xf]
        %v1677 = vld [vmem:[%s1673 + $0xc] sm:$0xf]
        %v1678 = vld [vmem:[%s1673 + $0x10] sm:$0xf]
        %v1679 = vld [vmem:[%s1673 + $0x14] sm:$0xf]
        %v1680 = vld [vmem:[%s1673 + $0x18] sm:$0xf]
        %v1681 = vld [vmem:[%s1673 + $0x1c] sm:$0xf]
        %v1682 = vld [vmem:[%s1673 + $0x20] sm:$0xf]
        %v1683 = vld [vmem:[%s1673 + $0x24] sm:$0xf]
        %v1684 = vld [vmem:[%s1673 + $0x28] sm:$0xf]
        %v1685 = vld [vmem:[%s1673 + $0x2c] sm:$0xf]
        %v1686 = vld [vmem:[%s1673 + $0x30] sm:$0xf]
        %v1687 = vld [vmem:[%s1673 + $0x34] sm:$0xf]
        %v1688 = vld [vmem:[%s1673 + $0x38] sm:$0xf]
        %v1689 = vld [vmem:[%s1673 + $0x3c] sm:$0xf]
        %v1706 = vunpack.c.l.b16 %v1674
        %v1707 = vunpack.c.l.b16 %v1675
        %v1708 = vunpack.c.l.b16 %v1676
        %v1709 = vunpack.c.l.b16 %v1677
        %v1710 = vunpack.c.l.b16 %v1678
        %v1711 = vunpack.c.l.b16 %v1679
        %v1712 = vunpack.c.l.b16 %v1680
        %v1713 = vunpack.c.l.b16 %v1681
        %v1714 = vunpack.c.l.b16 %v1682
        %v1715 = vunpack.c.l.b16 %v1683
        %v1716 = vunpack.c.l.b16 %v1684
        %v1717 = vunpack.c.l.b16 %v1685
        %v1718 = vunpack.c.l.b16 %v1686
        %v1719 = vunpack.c.l.b16 %v1687
        %v1720 = vunpack.c.l.b16 %v1688
        %v1721 = vunpack.c.l.b16 %v1689
        %v1722 = vpack.c.b16 %v1707, %v1706
        %v1723 = vpack.c.b16 %v1709, %v1708
        %v1724 = vpack.c.b16 %v1711, %v1710
        %v1725 = vpack.c.b16 %v1713, %v1712
        %v1726 = vpack.c.b16 %v1715, %v1714
        %v1727 = vpack.c.b16 %v1717, %v1716
        %v1728 = vpack.c.b16 %v1719, %v1718
        %v1729 = vpack.c.b16 %v1721, %v1720
        %1738 = vmatpush.bf16.msra.mxu0 %v1729
        %1739 = vmatpush.bf16.msra.mxu0 %v1728
        %1740 = vmatpush.bf16.msra.mxu0 %v1727
        %1741 = vmatpush.bf16.msra.mxu0 %v1726
        %1742 = vmatpush.bf16.msra.mxu0 %v1725
        %1743 = vmatpush.bf16.msra.mxu0 %v1724
        %1744 = vmatpush.bf16.msra.mxu0 %v1723
        %1745 = vmatpush.bf16.msra.mxu0 %v1722
        %1746 = vmatmul.bf16.gmra.mxu0 %v1669
        %v1747 = vpop.f32.mrf.mxu0
        %v1748 = vadd.f32 0.0, %v1747
        %v1749 = vpop.f32.mrf.mxu0
        %v1750 = vadd.f32 0.0, %v1749
        %1751 = vmatmul.bf16.gmra.mxu0 %v1670
        %v1752 = vpop.f32.mrf.mxu0
        %v1753 = vadd.f32 0.0, %v1752
        %v1754 = vpop.f32.mrf.mxu0
        %v1755 = vadd.f32 0.0, %v1754
        %1756 = vmatmul.bf16.gmra.mxu0 %v1671
        %v1757 = vpop.f32.mrf.mxu0
        %v1758 = vadd.f32 0.0, %v1757
        %v1759 = vpop.f32.mrf.mxu0
        %v1760 = vadd.f32 0.0, %v1759
        %1761 = vmatmul.bf16.gmra.mxu0 %v1672
        %v1762 = vpop.f32.mrf.mxu0
        %v1763 = vadd.f32 0.0, %v1762
        %v1764 = vpop.f32.mrf.mxu0
        %v1765 = vadd.f32 0.0, %v1764
        %1766 = vdwg.mxu0
        %v1767 = vadd.f32 %v1661, %v1748
        %v1768 = vadd.f32 %v1662, %v1750
        %v1769 = vadd.f32 %v1663, %v1753
        %v1770 = vadd.f32 %v1664, %v1755
        %v1771 = vadd.f32 %v1665, %v1758
        %v1772 = vadd.f32 %v1666, %v1760
        %v1773 = vadd.f32 %v1667, %v1763
        %v1774 = vadd.f32 %v1668, %v1765
        %v1775 = vpack.c.bf16 %v922, %v921
        %v1776 = vpack.c.bf16 %v924, %v923
        %v1777 = vpack.c.bf16 %v926, %v925
        %v1778 = vpack.c.bf16 %v928, %v927
        %s1779 = scalar_lea.vmem %s4, 448
        %v1780 = vld [vmem:[%s1779] sm:$0xf]
        %v1781 = vld [vmem:[%s1779 + $0x4] sm:$0xf]
        %v1782 = vld [vmem:[%s1779 + $0x8] sm:$0xf]
        %v1783 = vld [vmem:[%s1779 + $0xc] sm:$0xf]
        %v1784 = vld [vmem:[%s1779 + $0x10] sm:$0xf]
        %v1785 = vld [vmem:[%s1779 + $0x14] sm:$0xf]
        %v1786 = vld [vmem:[%s1779 + $0x18] sm:$0xf]
        %v1787 = vld [vmem:[%s1779 + $0x1c] sm:$0xf]
        %v1788 = vld [vmem:[%s1779 + $0x20] sm:$0xf]
        %v1789 = vld [vmem:[%s1779 + $0x24] sm:$0xf]
        %v1790 = vld [vmem:[%s1779 + $0x28] sm:$0xf]
        %v1791 = vld [vmem:[%s1779 + $0x2c] sm:$0xf]
        %v1792 = vld [vmem:[%s1779 + $0x30] sm:$0xf]
        %v1793 = vld [vmem:[%s1779 + $0x34] sm:$0xf]
        %v1794 = vld [vmem:[%s1779 + $0x38] sm:$0xf]
        %v1795 = vld [vmem:[%s1779 + $0x3c] sm:$0xf]
        %v1812 = vunpack.c.l.b16 %v1780
        %v1813 = vunpack.c.l.b16 %v1781
        %v1814 = vunpack.c.l.b16 %v1782
        %v1815 = vunpack.c.l.b16 %v1783
        %v1816 = vunpack.c.l.b16 %v1784
        %v1817 = vunpack.c.l.b16 %v1785
        %v1818 = vunpack.c.l.b16 %v1786
        %v1819 = vunpack.c.l.b16 %v1787
        %v1820 = vunpack.c.l.b16 %v1788
        %v1821 = vunpack.c.l.b16 %v1789
        %v1822 = vunpack.c.l.b16 %v1790
        %v1823 = vunpack.c.l.b16 %v1791
        %v1824 = vunpack.c.l.b16 %v1792
        %v1825 = vunpack.c.l.b16 %v1793
        %v1826 = vunpack.c.l.b16 %v1794
        %v1827 = vunpack.c.l.b16 %v1795
        %v1828 = vpack.c.b16 %v1813, %v1812
        %v1829 = vpack.c.b16 %v1815, %v1814
        %v1830 = vpack.c.b16 %v1817, %v1816
        %v1831 = vpack.c.b16 %v1819, %v1818
        %v1832 = vpack.c.b16 %v1821, %v1820
        %v1833 = vpack.c.b16 %v1823, %v1822
        %v1834 = vpack.c.b16 %v1825, %v1824
        %v1835 = vpack.c.b16 %v1827, %v1826
        %1844 = vmatpush.bf16.msra.mxu0 %v1835
        %1845 = vmatpush.bf16.msra.mxu0 %v1834
        %1846 = vmatpush.bf16.msra.mxu0 %v1833
        %1847 = vmatpush.bf16.msra.mxu0 %v1832
        %1848 = vmatpush.bf16.msra.mxu0 %v1831
        %1849 = vmatpush.bf16.msra.mxu0 %v1830
        %1850 = vmatpush.bf16.msra.mxu0 %v1829
        %1851 = vmatpush.bf16.msra.mxu0 %v1828
        %1852 = vmatmul.bf16.gmra.mxu0 %v1775
        %v1853 = vpop.f32.mrf.mxu0
        %v1854 = vadd.f32 0.0, %v1853
        %v1855 = vpop.f32.mrf.mxu0
        %v1856 = vadd.f32 0.0, %v1855
        %1857 = vmatmul.bf16.gmra.mxu0 %v1776
        %v1858 = vpop.f32.mrf.mxu0
        %v1859 = vadd.f32 0.0, %v1858
        %v1860 = vpop.f32.mrf.mxu0
        %v1861 = vadd.f32 0.0, %v1860
        %1862 = vmatmul.bf16.gmra.mxu0 %v1777
        %v1863 = vpop.f32.mrf.mxu0
        %v1864 = vadd.f32 0.0, %v1863
        %v1865 = vpop.f32.mrf.mxu0
        %v1866 = vadd.f32 0.0, %v1865
        %1867 = vmatmul.bf16.gmra.mxu0 %v1778
        %v1868 = vpop.f32.mrf.mxu0
        %v1869 = vadd.f32 0.0, %v1868
        %v1870 = vpop.f32.mrf.mxu0
        %v1871 = vadd.f32 0.0, %v1870
        %1872 = vdwg.mxu0
        %v1873 = vadd.f32 %v1767, %v1854
        %v1874 = vadd.f32 %v1768, %v1856
        %v1875 = vadd.f32 %v1769, %v1859
        %v1876 = vadd.f32 %v1770, %v1861
        %v1877 = vadd.f32 %v1771, %v1864
        %v1878 = vadd.f32 %v1772, %v1866
        %v1879 = vadd.f32 %v1773, %v1869
        %v1880 = vadd.f32 %v1774, %v1871
        %v1883 = vrot.slane %v918, 1
        %v1884 = vrot.slane %v919, 1
        %v1885 = vsel %vm1164, %v1883, %v1884
        %v1887 = vpack.c.bf16 %v1173, %v1170
        %v1888 = vpack.c.bf16 %v1179, %v1176
        %v1889 = vpack.c.bf16 %v1185, %v1182
        %v1890 = vpack.c.bf16 %v1885, %v1188
        %s1891 = scalar_lea.vmem %s4, 512
        %v1892 = vld [vmem:[%s1891] sm:$0xf]
        %v1893 = vld [vmem:[%s1891 + $0x4] sm:$0xf]
        %v1894 = vld [vmem:[%s1891 + $0x8] sm:$0xf]
        %v1895 = vld [vmem:[%s1891 + $0xc] sm:$0xf]
        %v1896 = vld [vmem:[%s1891 + $0x10] sm:$0xf]
        %v1897 = vld [vmem:[%s1891 + $0x14] sm:$0xf]
        %v1898 = vld [vmem:[%s1891 + $0x18] sm:$0xf]
        %v1899 = vld [vmem:[%s1891 + $0x1c] sm:$0xf]
        %v1900 = vld [vmem:[%s1891 + $0x20] sm:$0xf]
        %v1901 = vld [vmem:[%s1891 + $0x24] sm:$0xf]
        %v1902 = vld [vmem:[%s1891 + $0x28] sm:$0xf]
        %v1903 = vld [vmem:[%s1891 + $0x2c] sm:$0xf]
        %v1904 = vld [vmem:[%s1891 + $0x30] sm:$0xf]
        %v1905 = vld [vmem:[%s1891 + $0x34] sm:$0xf]
        %v1906 = vld [vmem:[%s1891 + $0x38] sm:$0xf]
        %v1907 = vld [vmem:[%s1891 + $0x3c] sm:$0xf]
        %v1924 = vunpack.c.l.b16 %v1892
        %v1925 = vunpack.c.l.b16 %v1893
        %v1926 = vunpack.c.l.b16 %v1894
        %v1927 = vunpack.c.l.b16 %v1895
        %v1928 = vunpack.c.l.b16 %v1896
        %v1929 = vunpack.c.l.b16 %v1897
        %v1930 = vunpack.c.l.b16 %v1898
        %v1931 = vunpack.c.l.b16 %v1899
        %v1932 = vunpack.c.l.b16 %v1900
        %v1933 = vunpack.c.l.b16 %v1901
        %v1934 = vunpack.c.l.b16 %v1902
        %v1935 = vunpack.c.l.b16 %v1903
        %v1936 = vunpack.c.l.b16 %v1904
        %v1937 = vunpack.c.l.b16 %v1905
        %v1938 = vunpack.c.l.b16 %v1906
        %v1939 = vunpack.c.l.b16 %v1907
        %v1940 = vpack.c.b16 %v1925, %v1924
        %v1941 = vpack.c.b16 %v1927, %v1926
        %v1942 = vpack.c.b16 %v1929, %v1928
        %v1943 = vpack.c.b16 %v1931, %v1930
        %v1944 = vpack.c.b16 %v1933, %v1932
        %v1945 = vpack.c.b16 %v1935, %v1934
        %v1946 = vpack.c.b16 %v1937, %v1936
        %v1947 = vpack.c.b16 %v1939, %v1938
        %1956 = vmatpush.bf16.msra.mxu0 %v1947
        %1957 = vmatpush.bf16.msra.mxu0 %v1946
        %1958 = vmatpush.bf16.msra.mxu0 %v1945
        %1959 = vmatpush.bf16.msra.mxu0 %v1944
        %1960 = vmatpush.bf16.msra.mxu0 %v1943
        %1961 = vmatpush.bf16.msra.mxu0 %v1942
        %1962 = vmatpush.bf16.msra.mxu0 %v1941
        %1963 = vmatpush.bf16.msra.mxu0 %v1940
        %1964 = vmatmul.bf16.gmra.mxu0 %v1887
        %v1965 = vpop.f32.mrf.mxu0
        %v1966 = vadd.f32 0.0, %v1965
        %v1967 = vpop.f32.mrf.mxu0
        %v1968 = vadd.f32 0.0, %v1967
        %1969 = vmatmul.bf16.gmra.mxu0 %v1888
        %v1970 = vpop.f32.mrf.mxu0
        %v1971 = vadd.f32 0.0, %v1970
        %v1972 = vpop.f32.mrf.mxu0
        %v1973 = vadd.f32 0.0, %v1972
        %1974 = vmatmul.bf16.gmra.mxu0 %v1889
        %v1975 = vpop.f32.mrf.mxu0
        %v1976 = vadd.f32 0.0, %v1975
        %v1977 = vpop.f32.mrf.mxu0
        %v1978 = vadd.f32 0.0, %v1977
        %1979 = vmatmul.bf16.gmra.mxu0 %v1890
        %v1980 = vpop.f32.mrf.mxu0
        %v1981 = vadd.f32 0.0, %v1980
        %v1982 = vpop.f32.mrf.mxu0
        %v1983 = vadd.f32 0.0, %v1982
        %1984 = vdwg.mxu0
        %v1985 = vadd.f32 %v1873, %v1966
        %v1986 = vadd.f32 %v1874, %v1968
        %v1987 = vadd.f32 %v1875, %v1971
        %v1988 = vadd.f32 %v1876, %v1973
        %v1989 = vadd.f32 %v1877, %v1976
        %v1990 = vadd.f32 %v1878, %v1978
        %v1991 = vadd.f32 %v1879, %v1981
        %v1992 = vadd.f32 %v1880, %v1983
        %v1993 = vld [vmem:[%s5] sm:$0x1]
        %v1995 = vperm.slane %v1993, 0
        %v1997 = vmul.f32 %v1985, %v1995
        %v1998 = vmul.f32 %v1986, %v1995
        %v1999 = vmul.f32 %v1987, %v1995
        %v2000 = vmul.f32 %v1988, %v1995
        %v2001 = vmul.f32 %v1989, %v1995
        %v2002 = vmul.f32 %v1990, %v1995
        %v2003 = vmul.f32 %v1991, %v1995
        %v2004 = vmul.f32 %v1992, %v1995
        %v2005 = vld [vmem:[%s6] sm:$0x1]
        %v2007 = vperm.slane %v2005, 0
        %v2009 = vadd.f32 %v1997, %v2007
        %v2010 = vadd.f32 %v1998, %v2007
        %v2011 = vadd.f32 %v1999, %v2007
        %v2012 = vadd.f32 %v2000, %v2007
        %v2013 = vadd.f32 %v2001, %v2007
        %v2014 = vadd.f32 %v2002, %v2007
        %v2015 = vadd.f32 %v2003, %v2007
        %v2016 = vadd.f32 %v2004, %v2007
        %vm2017 = vcmp.ge.f32.partialorder %v2009, 0.0
        %vm2018 = vcmp.ge.f32.partialorder %v2010, 0.0
        %vm2019 = vcmp.ge.f32.partialorder %v2011, 0.0
        %vm2020 = vcmp.ge.f32.partialorder %v2012, 0.0
        %vm2021 = vcmp.ge.f32.partialorder %v2013, 0.0
        %vm2022 = vcmp.ge.f32.partialorder %v2014, 0.0
        %vm2023 = vcmp.ge.f32.partialorder %v2015, 0.0
        %vm2024 = vcmp.ge.f32.partialorder %v2016, 0.0
        %v2025 = vmul.f32 %v2009, 0.01
        %v2026 = vmul.f32 %v2010, 0.01
        %v2027 = vmul.f32 %v2011, 0.01
        %v2028 = vmul.f32 %v2012, 0.01
        %v2029 = vmul.f32 %v2013, 0.01
        %v2030 = vmul.f32 %v2014, 0.01
        %v2031 = vmul.f32 %v2015, 0.01
        %v2032 = vmul.f32 %v2016, 0.01
        %v2033 = vsel %vm2017, %v2009, %v2025
        %v2034 = vsel %vm2018, %v2010, %v2026
        %v2035 = vsel %vm2019, %v2011, %v2027
        %v2036 = vsel %vm2020, %v2012, %v2028
        %v2037 = vsel %vm2021, %v2013, %v2029
        %v2038 = vsel %vm2022, %v2014, %v2030
        %v2039 = vsel %vm2023, %v2015, %v2031
        %v2040 = vsel %vm2024, %v2016, %v2032
        %2041 = vst [vmem:[%s274] sm:$0xff] %v2033
        %2042 = vst [vmem:[%s274 + $0x8] sm:$0xff] %v2034
        %2043 = vst [vmem:[%s274 + $0x10] sm:$0xff] %v2035
        %2044 = vst [vmem:[%s274 + $0x18] sm:$0xff] %v2036
        %2045 = vst [vmem:[%s274 + $0x20] sm:$0xff] %v2037
        %2046 = vst [vmem:[%s274 + $0x28] sm:$0xff] %v2038
        %2047 = vst [vmem:[%s274 + $0x30] sm:$0xff] %v2039
        %2048 = vst [vmem:[%s274 + $0x38] sm:$0xff] %v2040
        %s2049 = sand.u32 %s181, 1
        %s2050 = scalar_lea.sflag [#allocation3], %s2049
        %s2051 = sand.u32 %s181, 1
        %s2052 = smul.addr %s2051, 64
        %s2053 = scalar_lea.vmem [#allocation2], %s2052
        // Predicated region
        $region49: #{tpu_custom_call.1} parent=47 // pred_check
          %p2054 = pneg %p191
        $region50: #{tpu_custom_call.1} parent=47 // pred_check_branch
          %2056 = sbr.rel (%p2054) target = $region52
        $region51: #{tpu_custom_call.1} parent=47 // pred_region
          %2058 = vsyncadd %s2050, 0
          %s2059 = smul.addr %s21, 8
          %s2060 = smul.addr %s2059, 8
          %s2061 = scalar_lea.hbm %s7, %s2060
          %s2062 = sshll.u32 %s2053, 4
          %s2063 = int_to_ptr.vmem [resolvable:$true] %s2062
          %s2064 = sshll.u32 %s2061, 4
          %s2065 = int_to_ptr.hbm [resolvable:$true] %s2064
          %2070 = dma.vmem_to_hbm [thread:$0]  %s2063, 1024, %s2065, %s2050, 128, 128, 8
        $region52: #{tpu_custom_call.1} parent=47 // pred_fallthru
          _
      $region48: #{tpu_custom_call.1} parent=5 // pred_fallthru
        _
      %p2071 = scmp.le.s32.totalorder 2, %s16
      // Predicated region
      $region53: #{tpu_custom_call.1} parent=5 // pred_check
        %p2072 = pneg %p2071
      $region54: #{tpu_custom_call.1} parent=5 // pred_check_branch
        %2074 = sbr.rel (%p2072) target = $region56
      $region55: #{tpu_custom_call.1} parent=5 // pred_region
        %s2075 = ssub.s32 %s16, 2
        // Predicated region
        $region57: #{tpu_custom_call.1} parent=55 // pred_check
          %p2076 = pneg %p197
        $region58: #{tpu_custom_call.1} parent=55 // pred_check_branch
          %2078 = sbr.rel (%p2076) target = $region60
        $region59: #{tpu_custom_call.1} parent=55 // pred_region
          %s2079 = sand.u32 %s182, 1
          %s2080 = scalar_lea.sflag [#allocation3], %s2079
          %s2081 = sand.u32 %s182, 1
          %s2082 = smul.addr %s2081, 64
          %s2083 = scalar_lea.vmem [#allocation2], %s2082
          %2085 = dma.done %s2080, 1024
        $region60: #{tpu_custom_call.1} parent=55 // pred_fallthru
          _
      $region56: #{tpu_custom_call.1} parent=5 // pred_fallthru
        _
    $region6: #{tpu_custom_call.1} parent=1 // loop_footer
      %s20 = sadd.s32 1, %s16
    $region7: #{tpu_custom_call.1} parent=1 // loop_footer_branch
      %15 = sbr.rel target = $region3
    $region8: #{tpu_custom_call.1} parent=1 // loop_exit
      _
    %2086 = vsyncpa [#allocation3], 1
    %s2087 = scalar_lea.sflag [#allocation3], 1
    %2088 = vsyncpa %s2087, 1

</llo_original>
